<compile_context>
chip_gen: v7x
topology: tpu7x:2x2x1
jax: 0.10.0
libtpu: 0.0.40
codegen_flags: <defaults>
</compile_context>

<pallas_src>
import functools

import jax
import jax.numpy as jnp
from jax.experimental import pallas as pl
from jax.experimental.pallas import tpu as pltpu

MM_TM = 256                        # matmul row tile (full-K, full-Cout blocks)
MM_VMEM_LIMIT = 48 * 1024 * 1024   # stays inside v7x's 64 MiB physical VMEM


# ----------------------------------------------------------------------------- helpers
def _round_up(n, m):
    return ((n + m - 1) // m) * m


def _row_pad(m):
    # Big layers: 2048-aligned rows so elementwise kernels get >=1MB blocks.
    # Small layers: 128-aligned to keep wasted matmul rows minimal.
    return _round_up(m, 2048) if m >= 8192 else _round_up(m, 128)


def _pick_row_tile(rows, c_eff):
    """Largest row tile dividing `rows` with ~<=2MB of f32 per block-set."""
    cap = max(8, (2 * 1024 * 1024) // (c_eff * 4))
    for cand in (2048, 1024, 512, 256, 128, 64, 32, 16, 8):
        if cand <= cap and rows % cand == 0:
            return cand
    return rows


def _pad_axis(x, multiple, axis):
    pad = (-x.shape[axis]) % multiple
    if pad == 0:
        return x
    widths = [(0, 0)] * x.ndim
    widths[axis] = (0, pad)
    return jnp.pad(x, widths)


# ----------------------------------------------------------------------------- matmul with fused BN batch-stats epilogue
def _mm_stats_kernel(a_ref, b_ref, o_ref, st_ref):
    acc = jnp.dot(a_ref[...], b_ref[...], preferred_element_type=jnp.float32)
    o_ref[...] = acc
    s = jnp.sum(acc, axis=0, keepdims=True)           # (1, Cout)
    sq = jnp.sum(acc * acc, axis=0, keepdims=True)    # (1, Cout)
    rows = jax.lax.broadcasted_iota(jnp.int32, (8, acc.shape[1]), 0)
    st_ref[...] = jnp.where(rows == 0, s, jnp.where(rows == 1, sq, 0.0))[None]


def _matmul_stats(a_bf16, b_bf16):
    """A: [Mp, Kp] bf16 (zero row/K padding), B: [Kp, Cout] bf16.
    Returns (y [Mp, Cout] f32, stats [Mp//tm, 8, Cout] f32: rows 0/1 = sum/sumsq)."""
    mp, kp = a_bf16.shape
    cout = b_bf16.shape[1]
    tm = MM_TM if mp % MM_TM == 0 else 128
    nblk = mp // tm
    return pl.pallas_call(
        _mm_stats_kernel,
        out_shape=(jax.ShapeDtypeStruct((mp, cout), jnp.float32),
                   jax.ShapeDtypeStruct((nblk, 8, cout), jnp.float32)),
        grid_spec=pltpu.PrefetchScalarGridSpec(
            num_scalar_prefetch=0,
            grid=(nblk,),
            in_specs=[pl.BlockSpec((tm, kp), lambda i: (i, 0)),
                      pl.BlockSpec((kp, cout), lambda i: (0, 0))],
            out_specs=(pl.BlockSpec((tm, cout), lambda i: (i, 0)),
                       pl.BlockSpec((1, 8, cout), lambda i: (i, 0, 0)))),
        compiler_params=pltpu.CompilerParams(
            dimension_semantics=("parallel",),
            vmem_limit_bytes=MM_VMEM_LIMIT),
    )(a_bf16, b_bf16)


# ----------------------------------------------------------------------------- fused BN-apply / ReLU / residual kernels
def _ss_kernel(x_ref, s_ref, b_ref, o_ref):
    o_ref[...] = x_ref[...] * s_ref[...] + b_ref[...]


def _ss_relu_kernel(x_ref, s_ref, b_ref, o_ref):
    o_ref[...] = jnp.maximum(x_ref[...] * s_ref[...] + b_ref[...], 0.0)


def _ss_add_relu_kernel(x_ref, s_ref, b_ref, r_ref, o_ref):
    o_ref[...] = jnp.maximum(
        x_ref[...] * s_ref[...] + b_ref[...] + r_ref[...], 0.0)


def _ew_apply(kernel_fn, y, scale, shift, res=None):
    """y (and res): [Mp, C] f32 with Mp % 128 == 0.  C==64 is lane-packed to 128."""
    mp, c = y.shape
    g = 128 // c if c < 128 else 1
    if g > 1:
        y = y.reshape(mp // g, c * g)
        scale = jnp.tile(scale, (1, g))
        shift = jnp.tile(shift, (1, g))
        if res is not None:
            res = res.reshape(mp // g, c * g)
    rows, cp = y.shape
    tile = _pick_row_tile(rows, cp * (3 if res is not None else 2))
    in_specs = [pl.BlockSpec((tile, cp), lambda i: (i, 0)),
                pl.BlockSpec((1, cp), lambda i: (0, 0)),
                pl.BlockSpec((1, cp), lambda i: (0, 0))]
    args = [y, scale, shift]
    if res is not None:
        in_specs.append(pl.BlockSpec((tile, cp), lambda i: (i, 0)))
        args.append(res)
    out = pl.pallas_call(
        kernel_fn,
        out_shape=jax.ShapeDtypeStruct((rows, cp), jnp.float32),
        grid_spec=pltpu.PrefetchScalarGridSpec(
            num_scalar_prefetch=0, grid=(rows // tile,),
            in_specs=in_specs,
            out_specs=pl.BlockSpec((tile, cp), lambda i: (i, 0))),
        compiler_params=pltpu.CompilerParams(
            dimension_semantics=("parallel",)),
    )(*args)
    return out.reshape(mp, c)


# ----------------------------------------------------------------------------- BN scale/shift from fused stats
def _bn_from_stats(st, m, gamma, beta, eps=1e-5):
    # training-mode BatchNorm2d (PyTorch default): biased batch stats over (N,H,W)
    s = jnp.sum(st[:, 0, :], axis=0)
    sq = jnp.sum(st[:, 1, :], axis=0)
    mean = s / m
    var = jnp.maximum(sq / m - mean * mean, 0.0)   # guard cancellation
    inv = 1.0 / jnp.sqrt(var + eps)
    scale = gamma * inv
    shift = beta - mean * scale
    return scale.reshape(1, -1), shift.reshape(1, -1)


# ----------------------------------------------------------------------------- conv core (im2col in bf16 + matmul+stats)
def _conv_core(x, w, stride, padding):
    """x: [N,H,W,Cin] f32; w: [kh,kw,Cin,Cout] f32 (bias intentionally unused).
    Returns (y [Mp,Cout] f32 with zero padded rows, stats, true M, out NHWC shape)."""
    n, h, wd, cin = x.shape
    kh, kw, _, cout = w.shape
    ho = (h + 2 * padding - kh) // stride + 1
    wo = (wd + 2 * padding - kw) // stride + 1
    m = n * ho * wo
    mp = _row_pad(m)
    k = kh * kw * cin
    kp = _round_up(k, 128)

    xp = x
    if padding:
        xp = jnp.pad(x, ((0, 0), (padding, padding), (padding, padding), (0, 0)))
    xb = xp.astype(jnp.bfloat16)
    patches = []
    for i in range(kh):
        for j in range(kw):
            patches.append(xb[:, i:i + stride * (ho - 1) + 1:stride,
                               j:j + stride * (wo - 1) + 1:stride, :])
    a = jnp.stack(patches, axis=3).reshape(m, k)
    if mp != m or kp != k:
        a = jnp.pad(a, ((0, mp - m), (0, kp - k)))

    b = w.reshape(k, cout).astype(jnp.bfloat16)
    if kp != k:
        b = jnp.pad(b, ((0, kp - k), (0, 0)))

    y, st = _matmul_stats(a, b)
    return y, st, m, (n, ho, wo, cout)


# ----------------------------------------------------------------------------- per-layer jitted blocks
@functools.partial(jax.jit, static_argnames=("stride", "padding", "relu"))
def conv_bn(x, w, gamma, beta, *, stride, padding, relu):
    # Conv bias is omitted: a per-channel constant is exactly absorbed by the
    # training-mode BatchNorm that follows every conv in this model.
    y, st, m, shp = _conv_core(x, w, stride, padding)
    scale, shift = _bn_from_stats(st, m, gamma, beta)
    kern = _ss_relu_kernel if relu else _ss_kernel
    return _ew_apply(kern, y, scale, shift)[:m].reshape(shp)


@functools.partial(jax.jit,
                   static_argnames=("stride", "sc_stride", "has_shortcut"))
def residual_block_fwd(x, c1w, g1, b1, c2w, g2, b2, scw, scb, *,
                       stride, sc_stride, has_shortcut):
    # conv1 -> bn1 -> relu
    y1, st1, m1, shp1 = _conv_core(x, c1w, stride, 1)
    sc1, sh1 = _bn_from_stats(st1, m1, g1, b1)
    h = _ew_apply(_ss_relu_kernel, y1, sc1, sh1)[:m1].reshape(shp1)
    # conv2 -> bn2 (+ residual + relu fused in one elementwise pass)
    y2, st2, m2, shp2 = _conv_core(h, c2w, 1, 1)
    sc2, sh2 = _bn_from_stats(st2, m2, g2, b2)
    if has_shortcut:
        res, _, _, _ = _conv_core(x, scw, sc_stride, 0)
        sh2 = sh2 + scb.reshape(1, -1)        # fold shortcut bias into BN shift
    else:
        xf = x.reshape(-1, x.shape[-1])
        res = jnp.pad(xf, ((0, y2.shape[0] - xf.shape[0]), (0, 0)))
    out = _ew_apply(_ss_add_relu_kernel, y2, sc2, sh2, res)
    return out[:m2].reshape(shp2)


# ----------------------------------------------------------------------------- MaxPool2d(3, stride=2)
def _maxpool_kernel(x_ref, o_ref):
    o_ref[...] = jnp.max(x_ref[...], axis=0)


@jax.jit
def maxpool_3x3_s2(x):
    n, h, wd, c = x.shape
    ho = (h - 3) // 2 + 1
    wo = (wd - 3) // 2 + 1
    m = n * ho * wo
    slices = [x[:, i:i + 2 * (ho - 1) + 1:2, j:j + 2 * (wo - 1) + 1:2, :]
              for i in range(3) for j in range(3)]
    stacked = jnp.stack(slices, axis=0).reshape(9, m, c)
    mp = _round_up(m, 256)
    if mp != m:
        stacked = jnp.pad(stacked, ((0, 0), (0, mp - m), (0, 0)))
    g = 128 // c if c < 128 else 1
    stk = stacked.reshape(9, mp // g, c * g)           # lane-dense view
    rows, cp = stk.shape[1], stk.shape[2]
    tile = _pick_row_tile(rows, 9 * cp)
    out = pl.pallas_call(
        _maxpool_kernel,
        out_shape=jax.ShapeDtypeStruct((rows, cp), jnp.float32),
        grid_spec=pltpu.PrefetchScalarGridSpec(
            num_scalar_prefetch=0, grid=(rows // tile,),
            in_specs=[pl.BlockSpec((9, tile, cp), lambda i: (0, i, 0))],
            out_specs=pl.BlockSpec((tile, cp), lambda i: (i, 0))),
        compiler_params=pltpu.CompilerParams(
            dimension_semantics=("parallel",)),
    )(stk)
    return out.reshape(mp, c)[:m].reshape(n, ho, wo, c)


# ----------------------------------------------------------------------------- AvgPool2d(7) (single 7x7 window)
def _avgpool_kernel(x_ref, o_ref):
    o_ref[...] = jnp.mean(x_ref[...], axis=1)


@jax.jit
def avgpool(x3d):
    n, p, c = x3d.shape
    return pl.pallas_call(
        _avgpool_kernel,
        out_shape=jax.ShapeDtypeStruct((n, c), jnp.float32),
        grid_spec=pltpu.PrefetchScalarGridSpec(
            num_scalar_prefetch=0, grid=(1,),
            in_specs=[pl.BlockSpec((n, p, c), lambda i: (0, 0, 0))],
            out_specs=pl.BlockSpec((n, c), lambda i: (0, 0))),
    )(x3d)


# ----------------------------------------------------------------------------- FC (+ x - x%1 == floor(x))
def _fc_kernel(x_ref, w_ref, b_ref, o_ref, *, apply_floor):
    y = jnp.dot(x_ref[...], w_ref[...],
                preferred_element_type=jnp.float32) + b_ref[...]
    if apply_floor:
        y = jnp.floor(y)   # x - (x % 1) with positive modulus == floor(x)
    o_ref[...] = y


@functools.partial(jax.jit, static_argnames=("apply_floor",))
def fc(x, w, b, apply_floor=True):
    n, d = x.shape
    _, o = w.shape
    xp = _pad_axis(x, 8, 0)
    wp = _pad_axis(w, 128, 1)
    bp = _pad_axis(b.reshape(1, -1), 128, 1)
    np_, op_ = xp.shape[0], wp.shape[1]
    out = pl.pallas_call(
        functools.partial(_fc_kernel, apply_floor=apply_floor),
        out_shape=jax.ShapeDtypeStruct((np_, op_), jnp.float32),
        grid_spec=pltpu.PrefetchScalarGridSpec(
            num_scalar_prefetch=0, grid=(1,),
            in_specs=[pl.BlockSpec((np_, d), lambda i: (0, 0)),
                      pl.BlockSpec((d, op_), lambda i: (0, 0)),
                      pl.BlockSpec((1, op_), lambda i: (0, 0))],
            out_specs=pl.BlockSpec((np_, op_), lambda i: (0, 0))),
    )(xp, wp, bp)
    return out[:n, :o]


# ----------------------------------------------------------------------------- deterministic parameter init
def init_conv(key, kh, kw, cin, cout):
    kw_, kb_ = jax.random.split(key)
    fan_in = kh * kw * cin
    w = jax.random.normal(kw_, (kh, kw, cin, cout), jnp.float32) * jnp.sqrt(2.0 / fan_in)
    b = 0.01 * jax.random.normal(kb_, (cout,), jnp.float32)
    return {'w': w, 'b': b}


def init_bn(key, c):
    kg, kb = jax.random.split(key)
    return {'gamma': 1.0 + 0.1 * jax.random.normal(kg, (c,), jnp.float32),
            'beta': 0.05 * jax.random.normal(kb, (c,), jnp.float32)}


def init_block(key, cin, stride=1, is_plane=False, out_block=None):
    keys = jax.random.split(key, 5)
    cout2 = out_block if out_block is not None else cin
    p = {'stride': stride,
         'conv1': init_conv(keys[0], 3, 3, cin, cin),
         'bn1': init_bn(keys[1], cin),
         'conv2': init_conv(keys[2], 3, 3, cin, cout2),
         'bn2': init_bn(keys[3], cout2)}
    if out_block is not None:
        p['shortcut'] = init_conv(keys[4], 1, 1, cin, out_block)
        p['sc_stride'] = 1
    elif stride == 2 or is_plane:
        p['shortcut'] = init_conv(keys[4], 1, 1, cin, cin)
        p['sc_stride'] = stride
    return p


def init_stage(key, cin, out_block, start_stride, n_block):
    keys = jax.random.split(key, n_block)
    blocks = [init_block(keys[0], cin, stride=start_stride,
                         is_plane=(start_stride == 1))]
    for i in range(1, n_block - 1):
        blocks.append(init_block(keys[i], cin))
    blocks.append(init_block(keys[n_block - 1], cin, out_block=out_block))
    return blocks


def init_model(key, n_classes=None, is_classification=False):
    ks = jax.random.split(key, 12)
    out_net = n_classes if (is_classification and n_classes is not None) else 1
    dlin = 1.0 / jnp.sqrt(512.0)
    return {
        'conv00': init_conv(ks[0], 3, 3, 3, 64), 'bn00': init_bn(ks[1], 64),
        'conv01': init_conv(ks[2], 3, 3, 64, 64), 'bn01': init_bn(ks[3], 64),
        'conv1': init_conv(ks[4], 7, 7, 64, 64), 'bn1': init_bn(ks[5], 64),
        'stage2': init_stage(ks[6], 64, 128, 1, 3),
        'stage3': init_stage(ks[7], 128, 256, 2, 4),
        'stage4': init_stage(ks[8], 256, 512, 2, 6),
        'stage5': init_stage(ks[9], 512, 512, 2, 3),
        'fc_w': jax.random.uniform(ks[10], (512, out_net), jnp.float32, -dlin, dlin),
        'fc_b': jax.random.uniform(ks[11], (out_net,), jnp.float32, -dlin, dlin),
        'is_classification': is_classification,
    }


# ----------------------------------------------------------------------------- full forward
def forward(params, x_nchw):
    x = jnp.transpose(x_nchw, (0, 2, 3, 1)).astype(jnp.float32)   # NCHW -> NHWC
    # pretrain_part: conv-bn-conv-bn-relu
    x = conv_bn(x, params['conv00']['w'], params['bn00']['gamma'],
                params['bn00']['beta'], stride=1, padding=1, relu=False)
    x = conv_bn(x, params['conv01']['w'], params['bn01']['gamma'],
                params['bn01']['beta'], stride=1, padding=1, relu=True)
    # stage1: conv7x7/s2/p4 - bn - relu - maxpool3/s2
    x = conv_bn(x, params['conv1']['w'], params['bn1']['gamma'],
                params['bn1']['beta'], stride=2, padding=4, relu=True)
    x = maxpool_3x3_s2(x)
    for name in ('stage2', 'stage3', 'stage4', 'stage5'):
        for blk in params[name]:
            has_sc = 'shortcut' in blk
            x = residual_block_fwd(
                x,
                blk['conv1']['w'], blk['bn1']['gamma'], blk['bn1']['beta'],
                blk['conv2']['w'], blk['bn2']['gamma'], blk['bn2']['beta'],
                blk['shortcut']['w'] if has_sc else None,
                blk['shortcut']['b'] if has_sc else None,
                stride=blk['stride'],
                sc_stride=blk.get('sc_stride', 1),
                has_shortcut=has_sc)
    n, h, w, c = x.shape
    x = x[:, :7, :7, :].reshape(n, 49, c)          # AvgPool2d(7): single window
    x = avgpool(x)                                  # [N, 512]
    # fc + (x - x % 1) == floor(x) when not classification
    out = fc(x, params['fc_w'], params['fc_b'],
             apply_floor=not params['is_classification'])
    return out


if __name__ == "__main__":
    key = jax.random.PRNGKey(0)
    pkey, xkey = jax.random.split(key)
    params = init_model(pkey)
    # 195x195 is the smallest spatial size for which the module's forward is
    # well-formed (stage5 output 7x7 -> AvgPool2d(7) -> 1x1 -> Linear(512, 1)).
    x = jax.random.normal(xkey, (2, 3, 195, 195), jnp.float32)   # NCHW like PyTorch
    out = forward(params, x)
    out = jax.block_until_ready(out)
    assert out.shape == (2, 1) and out.dtype == jnp.float32
    print("KERNEL_OK")
</pallas_src>

<mosaic_0001>
module attributes {stable_mosaic.version = 11 : i64} {
  func.func @_mm_stats_kernel(%arg0: i32, %arg1: memref<256x128xbf16, #tpu.memory_space<vmem>>, %arg2: memref<128x64xbf16, #tpu.memory_space<vmem>>, %arg3: memref<256x64xf32, #tpu.memory_space<vmem>>, %arg4: memref<1x8x64xf32, #tpu.memory_space<vmem>>) attributes {dimension_semantics = [#tpu.dimension_semantics<parallel>], iteration_bounds = array<i64: 304>, scalar_prefetch = 0 : i64, scratch_operands = 0 : i64, tpu.core_type = #tpu.core_type<tc>, window_params = [{transform_indices = @transform_0, window_bounds = array<i64: 256, 128>}, {pipeline_mode = #tpu.pipeline_mode<synchronous>, transform_indices = @transform_1, window_bounds = array<i64: 128, 64>}, {transform_indices = @transform_2, window_bounds = array<i64: 256, 64>}, {transform_indices = @transform_3, window_bounds = array<i64: 1, 8, 64>}]} {
    %c0 = arith.constant 0 : index
    %c0_0 = arith.constant 0 : index
    %0 = vector.load %arg1[%c0, %c0_0] : memref<256x128xbf16, #tpu.memory_space<vmem>>, vector<256x128xbf16>
    %c0_1 = arith.constant 0 : index
    %c0_2 = arith.constant 0 : index
    %1 = vector.load %arg2[%c0_1, %c0_2] : memref<128x64xbf16, #tpu.memory_space<vmem>>, vector<128x64xbf16>
    %cst = arith.constant dense<0.000000e+00> : vector<256x64xf32>
    %2 = tpu.matmul %0, %1, %cst {dimension_numbers = #tpu.dot_dimension_numbers<[1], [0], [0], [1], [0, 0, 1, 1], [], []>} : vector<256x128xbf16>, vector<128x64xbf16>, vector<256x64xf32> -> vector<256x64xf32>
    %c0_3 = arith.constant 0 : index
    %c0_4 = arith.constant 0 : index
    %3 = vector.load %arg3[%c0_3, %c0_4] : memref<256x64xf32, #tpu.memory_space<vmem>>, vector<256x64xf32>
    tpu.vector_store %arg3[%c0_3, %c0_4], %2 {strides = array<i32>} : memref<256x64xf32, #tpu.memory_space<vmem>>, vector<256x64xf32>,
    %cst_5 = arith.constant dense<0.000000e+00> : vector<64xf32>
    %4 = vector.multi_reduction <add>, %2, %cst_5 [0] : vector<256x64xf32> to vector<64xf32>
    %5 = vector.shape_cast %4 : vector<64xf32> to vector<1x64xf32>
    %6 = arith.mulf %2, %2 : vector<256x64xf32>
    %cst_6 = arith.constant dense<0.000000e+00> : vector<64xf32>
    %7 = vector.multi_reduction <add>, %6, %cst_6 [0] : vector<256x64xf32> to vector<64xf32>
    %8 = vector.shape_cast %7 : vector<64xf32> to vector<1x64xf32>
    %9 = tpu.iota {dimensions = array<i32: 0>} : vector<8x64xi32>
    %c0_i32 = arith.constant 0 : i32
    %10 = vector.broadcast %c0_i32 : i32 to vector<8x64xi32>
    %11 = arith.cmpi eq, %9, %10 : vector<8x64xi32>
    %c1_i32 = arith.constant 1 : i32
    %12 = vector.broadcast %c1_i32 : i32 to vector<8x64xi32>
    %13 = arith.cmpi eq, %9, %12 : vector<8x64xi32>
    %cst_7 = arith.constant 0.000000e+00 : f32
    %14 = vector.shape_cast %8 : vector<1x64xf32> to vector<1x64xf32>
    %15 = vector.broadcast %14 : vector<1x64xf32> to vector<8x64xf32>
    %16 = vector.broadcast %cst_7 : f32 to vector<8x64xf32>
    %17 = arith.select %13, %15, %16 : vector<8x64xi1>, vector<8x64xf32>
    %18 = vector.shape_cast %5 : vector<1x64xf32> to vector<1x64xf32>
    %19 = vector.broadcast %18 : vector<1x64xf32> to vector<8x64xf32>
    %20 = arith.select %11, %19, %17 : vector<8x64xi1>, vector<8x64xf32>
    %21 = vector.shape_cast %20 : vector<8x64xf32> to vector<1x8x64xf32>
    %c0_8 = arith.constant 0 : index
    %c0_9 = arith.constant 0 : index
    %c0_10 = arith.constant 0 : index
    %22 = vector.load %arg4[%c0_8, %c0_9, %c0_10] : memref<1x8x64xf32, #tpu.memory_space<vmem>>, vector<1x8x64xf32>
    tpu.vector_store %arg4[%c0_8, %c0_9, %c0_10], %21 {strides = array<i32>} : memref<1x8x64xf32, #tpu.memory_space<vmem>>, vector<1x8x64xf32>,
    return
  }
  func.func @transform_0(%arg0: i32) -> (i32, i32) {
    %c0_i32 = arith.constant 0 : i32
    %c0_i32_0 = arith.constant 0 : i32
    return %arg0, %c0_i32 : i32, i32
  }
  func.func @transform_1(%arg0: i32) -> (i32, i32) {
    %c0_i32 = arith.constant 0 : i32
    %c0_i32_0 = arith.constant 0 : i32
    %c0_i32_1 = arith.constant 0 : i32
    return %c0_i32, %c0_i32_0 : i32, i32
  }
  func.func @transform_2(%arg0: i32) -> (i32, i32) {
    %c0_i32 = arith.constant 0 : i32
    %c0_i32_0 = arith.constant 0 : i32
    return %arg0, %c0_i32 : i32, i32
  }
  func.func @transform_3(%arg0: i32) -> (i32, i32, i32) {
    %c0_i32 = arith.constant 0 : i32
    %c0_i32_0 = arith.constant 0 : i32
    %c0_i32_1 = arith.constant 0 : i32
    return %arg0, %c0_i32, %c0_i32_0 : i32, i32, i32
  }
}

module attributes {stable_mosaic.version = 11 : i64} {
  func.func @_ss_kernel(%arg0: i32, %arg1: memref<2048x128xf32, #tpu.memory_space<vmem>>, %arg2: memref<1x128xf32, #tpu.memory_space<vmem>>, %arg3: memref<1x128xf32, #tpu.memory_space<vmem>>, %arg4: memref<2048x128xf32, #tpu.memory_space<vmem>>) attributes {dimension_semantics = [#tpu.dimension_semantics<parallel>], iteration_bounds = array<i64: 19>, scalar_prefetch = 0 : i64, scratch_operands = 0 : i64, tpu.core_type = #tpu.core_type<tc>, window_params = [{transform_indices = @transform_0, window_bounds = array<i64: 2048, 128>}, {pipeline_mode = #tpu.pipeline_mode<synchronous>, transform_indices = @transform_1, window_bounds = array<i64: 1, 128>}, {pipeline_mode = #tpu.pipeline_mode<synchronous>, transform_indices = @transform_2, window_bounds = array<i64: 1, 128>}, {transform_indices = @transform_3, window_bounds = array<i64: 2048, 128>}]} {
    %c0 = arith.constant 0 : index
    %c0_0 = arith.constant 0 : index
    %0 = vector.load %arg1[%c0, %c0_0] : memref<2048x128xf32, #tpu.memory_space<vmem>>, vector<2048x128xf32>
    %c0_1 = arith.constant 0 : index
    %c0_2 = arith.constant 0 : index
    %1 = vector.load %arg2[%c0_1, %c0_2] : memref<1x128xf32, #tpu.memory_space<vmem>>, vector<1x128xf32>
    %2 = vector.broadcast %1 : vector<1x128xf32> to vector<2048x128xf32>
    %3 = arith.mulf %0, %2 : vector<2048x128xf32>
    %c0_3 = arith.constant 0 : index
    %c0_4 = arith.constant 0 : index
    %4 = vector.load %arg3[%c0_3, %c0_4] : memref<1x128xf32, #tpu.memory_space<vmem>>, vector<1x128xf32>
    %5 = vector.broadcast %4 : vector<1x128xf32> to vector<2048x128xf32>
    %6 = arith.addf %3, %5 : vector<2048x128xf32>
    %c0_5 = arith.constant 0 : index
    %c0_6 = arith.constant 0 : index
    %7 = vector.load %arg4[%c0_5, %c0_6] : memref<2048x128xf32, #tpu.memory_space<vmem>>, vector<2048x128xf32>
    tpu.vector_store %arg4[%c0_5, %c0_6], %6 {strides = array<i32>} : memref<2048x128xf32, #tpu.memory_space<vmem>>, vector<2048x128xf32>,
    return
  }
  func.func @transform_0(%arg0: i32) -> (i32, i32) {
    %c0_i32 = arith.constant 0 : i32
    %c0_i32_0 = arith.constant 0 : i32
    return %arg0, %c0_i32 : i32, i32
  }
  func.func @transform_1(%arg0: i32) -> (i32, i32) {
    %c0_i32 = arith.constant 0 : i32
    %c0_i32_0 = arith.constant 0 : i32
    %c0_i32_1 = arith.constant 0 : i32
    return %c0_i32, %c0_i32_0 : i32, i32
  }
  func.func @transform_2(%arg0: i32) -> (i32, i32) {
    %c0_i32 = arith.constant 0 : i32
    %c0_i32_0 = arith.constant 0 : i32
    %c0_i32_1 = arith.constant 0 : i32
    return %c0_i32, %c0_i32_0 : i32, i32
  }
  func.func @transform_3(%arg0: i32) -> (i32, i32) {
    %c0_i32 = arith.constant 0 : i32
    %c0_i32_0 = arith.constant 0 : i32
    return %arg0, %c0_i32 : i32, i32
  }
}

</mosaic_0001>

<llo_original>
// kernel: conv_bn.2
$region0: #{conv_bn.2}
  #allocation0 [shape = 'u32[]', space=smem, size = 0x4, offset = 0x4, fixed_abs, tag = 'smem constant byte address 0x4 - core index']
  #allocation1 [shape = 'u32[144,128]{1,0:T(1,128)}', space=vmem, size = 0x12000, scoped, tag = 'internal scratch']
  %s0 = inlined_call_operand.hbm [shape: bf16[77824,128], index: 0, kind: input, shape index: {}]
  %s1 = inlined_call_operand.vmem [shape: bf16[128,64], index: 1, kind: input, shape index: {}]
  %s2 = inlined_call_operand.hbm [shape: f32[77824,64], index: 2, kind: output, shape index: {0}]
  %s3 = inlined_call_operand.vmem [shape: f32[304,8,64], index: 3, kind: output, shape index: {1}]
  %4 = xla_tuple %s2, %s3
  %s5 = sld [smem:[#allocation0]]
  $region53: #{conv_bn.2} parent=0
    _
  %s7 = ssub.s32 1, %s5
  %s8 = scalar_select 0, %s7, %s5
  $region1: #{conv_bn.2} parent=0
    #allocation2 [shape = 'u8[131072]{0}', space=vmem, size = 0x20000, scoped, tag = 'input window, operand 0']
    #allocation3 [shape = 's32[2]{0}', space=sflag, size = 0x8, scoped, tag = 'scoped memory for conv_bn.2']
    #allocation4 [shape = 's32[2]{0}', space=sflag, size = 0x8, scoped, tag = 'scoped memory for conv_bn.2']
    #allocation5 [shape = 'u8[262144]{0}', space=vmem, size = 0x40000, scoped, tag = 'output window, operand 0']
    %9 = vsyncpa [#allocation3], 0
    %s10 = scalar_lea.sflag [#allocation3], 1
    %11 = vsyncpa %s10, 0
    %12 = vsyncpa [#allocation4], 0
    %s13 = scalar_lea.sflag [#allocation4], 1
    %14 = vsyncpa %s13, 0
    loop: start=0, step=1, limit=306
    $region2: #{conv_bn.2} parent=1 // loop_pre_header
      _
    $region3: #{conv_bn.2} parent=1 // loop_header
      %s16 = sphi 0, %s20
      %p17 = scmp.ge.s32.totalorder %s16, 306
      %s26 = sphi 0, %s28
      %s29 = sphi 0, %s26
      %s30 = sphi 0, %s29
      %s46 = sphi 0, %s30
      %s50 = sphi 0, %s50
      %s52 = sphi 0, %s50
      %s53 = sphi 0, %s52
      %s67 = sphi 0, %s53
      %s73 = sphi 0, %s75
      %s76 = sphi 0, %s73
      %s77 = sphi 0, %s76
      %s93 = sphi 0, %s77
      %s99 = sphi 0, %s101
      %s102 = sphi 0, %s99
      %s103 = sphi 0, %s102
      %s119 = sphi 0, %s103
    $region4: #{conv_bn.2} parent=1 // loop_header_branch
      %19 = sbr.rel (%p17) target = $region8
    $region5: #{conv_bn.2} parent=1 // loop_body
      %s21 = ssub.s32 %s16, 1
      %s22 = ssub.s32 %s16, 2
      %s23 = sadd.s32 %s16, 1
      %s24 = ssub.s32 %s16, %s23
      %p25 = scmp.eq.s32.totalorder %s24, 0
      %s27 = sadd.s32 %s26, 1
      %s28 = scalar_select %p25, %s26, %s27
      %p31 = pneg %p25
      %p32 = scmp.eq.s32.totalorder %s16, 303
      %p33 = por %p31, %p32
      %p34 = scmp.ne.s32.totalorder %s26, %s29
      %p35 = scmp.eq.s32.totalorder %s16, 0
      %p36 = por %p34, %p35
      %p37 = scmp.ne.s32.totalorder %s26, %s29
      %p38 = scmp.eq.s32.totalorder %s21, 303
      %p39 = por %p37, %p38
      %p40 = scmp.ne.s32.totalorder %s29, %s30
      %p41 = scmp.eq.s32.totalorder %s21, 0
      %p42 = por %p40, %p41
      %p43 = scmp.ne.s32.totalorder %s29, %s30
      %p44 = scmp.eq.s32.totalorder %s22, 303
      %p45 = por %p43, %p44
      %p47 = scmp.ne.s32.totalorder %s30, %s46
      %p48 = scmp.eq.s32.totalorder %s22, 0
      %p49 = por %p47, %p48
      %s51 = sadd.s32 %s50, 1
      %p54 = scmp.eq.s32.totalorder %s16, 303
      %p55 = scmp.ne.s32.totalorder %s50, %s52
      %p56 = scmp.eq.s32.totalorder %s16, 0
      %p57 = por %p55, %p56
      %p58 = scmp.ne.s32.totalorder %s50, %s52
      %p59 = scmp.eq.s32.totalorder %s21, 303
      %p60 = por %p58, %p59
      %p61 = scmp.ne.s32.totalorder %s52, %s53
      %p62 = scmp.eq.s32.totalorder %s21, 0
      %p63 = por %p61, %p62
      %p64 = scmp.ne.s32.totalorder %s52, %s53
      %p65 = scmp.eq.s32.totalorder %s22, 303
      %p66 = por %p64, %p65
      %p68 = scmp.ne.s32.totalorder %s53, %s67
      %p69 = scmp.eq.s32.totalorder %s22, 0
      %p70 = por %p68, %p69
      %s71 = ssub.s32 %s16, %s23
      %p72 = scmp.eq.s32.totalorder %s71, 0
      %s74 = sadd.s32 %s73, 1
      %s75 = scalar_select %p72, %s73, %s74
      %p78 = pneg %p72
      %p79 = scmp.eq.s32.totalorder %s16, 303
      %p80 = por %p78, %p79
      %p81 = scmp.ne.s32.totalorder %s73, %s76
      %p82 = scmp.eq.s32.totalorder %s16, 0
      %p83 = por %p81, %p82
      %p84 = scmp.ne.s32.totalorder %s73, %s76
      %p85 = scmp.eq.s32.totalorder %s21, 303
      %p86 = por %p84, %p85
      %p87 = scmp.ne.s32.totalorder %s76, %s77
      %p88 = scmp.eq.s32.totalorder %s21, 0
      %p89 = por %p87, %p88
      %p90 = scmp.ne.s32.totalorder %s76, %s77
      %p91 = scmp.eq.s32.totalorder %s22, 303
      %p92 = por %p90, %p91
      %p94 = scmp.ne.s32.totalorder %s77, %s93
      %p95 = scmp.eq.s32.totalorder %s22, 0
      %p96 = por %p94, %p95
      %s97 = ssub.s32 %s16, %s23
      %p98 = scmp.eq.s32.totalorder %s97, 0
      %s100 = sadd.s32 %s99, 1
      %s101 = scalar_select %p98, %s99, %s100
      %p104 = pneg %p98
      %p105 = scmp.eq.s32.totalorder %s16, 303
      %p106 = por %p104, %p105
      %p107 = scmp.ne.s32.totalorder %s99, %s102
      %p108 = scmp.eq.s32.totalorder %s16, 0
      %p109 = por %p107, %p108
      %p110 = scmp.ne.s32.totalorder %s99, %s102
      %p111 = scmp.eq.s32.totalorder %s21, 303
      %p112 = por %p110, %p111
      %p113 = scmp.ne.s32.totalorder %s102, %s103
      %p114 = scmp.eq.s32.totalorder %s21, 0
      %p115 = por %p113, %p114
      %p116 = scmp.ne.s32.totalorder %s102, %s103
      %p117 = scmp.eq.s32.totalorder %s22, 303
      %p118 = por %p116, %p117
      %p120 = scmp.ne.s32.totalorder %s103, %s119
      %p121 = scmp.eq.s32.totalorder %s22, 0
      %p122 = por %p120, %p121
      %p123 = scmp.le.s32.totalorder 1, %s16
      %p124 = scmp.lt.s32.totalorder %s16, 305
      %p125 = pnand %p123, %p124
      %p126 = pneg %p125
      // Predicated region
      $region9: #{conv_bn.2} parent=5 // pred_check
        _
      $region10: #{conv_bn.2} parent=5 // pred_check_branch
        %128 = sbr.rel (%p125) target = $region12
      $region11: #{conv_bn.2} parent=5 // pred_region
        %s129 = ssub.s32 %s16, 1
        // Predicated region
        $region13: #{conv_bn.2} parent=11 // pred_check
          %p130 = pneg %p63
        $region14: #{conv_bn.2} parent=11 // pred_check_branch
          %132 = sbr.rel (%p130) target = $region16
        $region15: #{conv_bn.2} parent=11 // pred_region
          _
        $region16: #{conv_bn.2} parent=11 // pred_fallthru
          _
      $region12: #{conv_bn.2} parent=5 // pred_fallthru
        _
      %p133 = scmp.lt.s32.totalorder %s16, 304
      // Predicated region
      $region17: #{conv_bn.2} parent=5 // pred_check
        %p134 = pneg %p133
      $region18: #{conv_bn.2} parent=5 // pred_check_branch
        %136 = sbr.rel (%p134) target = $region20
      $region19: #{conv_bn.2} parent=5 // pred_region
        // Predicated region
        $region21: #{conv_bn.2} parent=19 // pred_check
          %p137 = pneg %p36
        $region22: #{conv_bn.2} parent=19 // pred_check_branch
          %139 = sbr.rel (%p137) target = $region24
        $region23: #{conv_bn.2} parent=19 // pred_region
          %s140 = sand.u32 %s26, 1
          %s141 = scalar_lea.sflag [#allocation3], %s140
          %s142 = sand.u32 %s26, 1
          %s143 = smul.addr %s142, 128
          %s144 = scalar_lea.vmem [#allocation2], %s143
          %s145 = smul.u32 32, %s16
          %s147 = ssub.s32 2048, 2048
          %148 = vsyncadd %s141, %s147
          %s149 = smul.addr %s145, 64
          %s150 = scalar_lea.hbm %s0, %s149
          %s151 = sshll.u32 %s144, 4
          %s152 = int_to_ptr.vmem [resolvable:$true] %s151
          %157 = dma.hbm_to_vmem [thread:$0]  %s150, 2048, %s152, %s141, 64, 64, 4
        $region24: #{conv_bn.2} parent=19 // pred_fallthru
          _
      $region20: #{conv_bn.2} parent=5 // pred_fallthru
        _
      %p158 = scmp.le.s32.totalorder 1, %s16
      %p159 = scmp.lt.s32.totalorder %s16, 305
      %p160 = pnand %p158, %p159
      %p161 = pneg %p160
      // Predicated region
      $region25: #{conv_bn.2} parent=5 // pred_check
        _
      $region26: #{conv_bn.2} parent=5 // pred_check_branch
        %163 = sbr.rel (%p160) target = $region28
      $region27: #{conv_bn.2} parent=5 // pred_region
        %s164 = ssub.s32 %s16, 1
        %s165 = sand.u32 %s29, 1
        %s166 = scalar_lea.sflag [#allocation3], %s165
        %s167 = sand.u32 %s29, 1
        %s168 = smul.addr %s167, 128
        %s169 = scalar_lea.vmem [#allocation2], %s168
        // Predicated region
        $region29: #{conv_bn.2} parent=27 // pred_check
          %p170 = pneg %p42
        $region30: #{conv_bn.2} parent=27 // pred_check_branch
          %172 = sbr.rel (%p170) target = $region32
        $region31: #{conv_bn.2} parent=27 // pred_region
          %173 = dma.done %s166, 2048
        $region32: #{conv_bn.2} parent=27 // pred_fallthru
          _
        %s174 = sand.u32 %s29, 1
        %s175 = scalar_lea.sflag [#allocation3], %s174
        %s176 = sand.u32 %s29, 1
        %s177 = smul.addr %s176, 128
        %s178 = scalar_lea.vmem [#allocation2], %s177
        %p179 = pneg %p42
        %p180 = pneg %p39
        %p181 = pneg %p63
        %p182 = pneg %p60
        %p183 = pneg %p89
        %p184 = pneg %p86
        %s185 = sand.u32 %s76, 1
        %s186 = scalar_lea.sflag [#allocation4], %s185
        %s187 = sand.u32 %s76, 1
        %s188 = smul.addr %s187, 256
        %s189 = scalar_lea.vmem [#allocation5], %s188
        %p190 = pneg %p115
        %p191 = pneg %p112
        %p192 = scmp.lt.s32.totalorder %s21, 303
        %s193 = scalar_select %p192, %s21, 303
        %s194 = smul.addr %s193, 8
        %s195 = scalar_lea.vmem %s3, %s194
        %s196 = smul.u32 32, %s21
        %s197 = smul.u32 32, %s21
        %p198 = scmp.lt.s32.totalorder %s21, 303
        %s199 = scalar_select %p198, %s21, 303
        %s200 = smul.addr %s199, 8
        %s201 = scalar_lea.vmem %s3, %s200
        %v203 = vld [vmem:[%s169] sm:$0xf]
        %v204 = vld [vmem:[%s169 + $0x4] sm:$0xf]
        %v205 = vld [vmem:[%s169 + $0x8] sm:$0xf]
        %v206 = vld [vmem:[%s169 + $0xc] sm:$0xf]
        %v207 = vld [vmem:[%s169 + $0x10] sm:$0xf]
        %v208 = vld [vmem:[%s169 + $0x14] sm:$0xf]
        %v209 = vld [vmem:[%s169 + $0x18] sm:$0xf]
        %v210 = vld [vmem:[%s169 + $0x1c] sm:$0xf]
        %v211 = vld [vmem:[%s169 + $0x20] sm:$0xf]
        %v212 = vld [vmem:[%s169 + $0x24] sm:$0xf]
        %v213 = vld [vmem:[%s169 + $0x28] sm:$0xf]
        %v214 = vld [vmem:[%s169 + $0x2c] sm:$0xf]
        %v215 = vld [vmem:[%s169 + $0x30] sm:$0xf]
        %v216 = vld [vmem:[%s169 + $0x34] sm:$0xf]
        %v217 = vld [vmem:[%s169 + $0x38] sm:$0xf]
        %v218 = vld [vmem:[%s169 + $0x3c] sm:$0xf]
        %v219 = vld [vmem:[%s169 + $0x40] sm:$0xf]
        %v220 = vld [vmem:[%s169 + $0x44] sm:$0xf]
        %v221 = vld [vmem:[%s169 + $0x48] sm:$0xf]
        %v222 = vld [vmem:[%s169 + $0x4c] sm:$0xf]
        %v223 = vld [vmem:[%s169 + $0x50] sm:$0xf]
        %v224 = vld [vmem:[%s169 + $0x54] sm:$0xf]
        %v225 = vld [vmem:[%s169 + $0x58] sm:$0xf]
        %v226 = vld [vmem:[%s169 + $0x5c] sm:$0xf]
        %v227 = vld [vmem:[%s169 + $0x60] sm:$0xf]
        %v228 = vld [vmem:[%s169 + $0x64] sm:$0xf]
        %v229 = vld [vmem:[%s169 + $0x68] sm:$0xf]
        %v230 = vld [vmem:[%s169 + $0x6c] sm:$0xf]
        %v231 = vld [vmem:[%s169 + $0x70] sm:$0xf]
        %v232 = vld [vmem:[%s169 + $0x74] sm:$0xf]
        %v233 = vld [vmem:[%s169 + $0x78] sm:$0xf]
        %v234 = vld [vmem:[%s169 + $0x7c] sm:$0xf]
        %v235 = vld [vmem:[%s1] sm:$0xf]
        %v236 = vld [vmem:[%s1 + $0x4] sm:$0xf]
        %v237 = vld [vmem:[%s1 + $0x8] sm:$0xf]
        %v238 = vld [vmem:[%s1 + $0xc] sm:$0xf]
        %v239 = vld [vmem:[%s1 + $0x10] sm:$0xf]
        %v240 = vld [vmem:[%s1 + $0x14] sm:$0xf]
        %v241 = vld [vmem:[%s1 + $0x18] sm:$0xf]
        %v242 = vld [vmem:[%s1 + $0x1c] sm:$0xf]
        %v243 = vld [vmem:[%s1 + $0x20] sm:$0xf]
        %v244 = vld [vmem:[%s1 + $0x24] sm:$0xf]
        %v245 = vld [vmem:[%s1 + $0x28] sm:$0xf]
        %v246 = vld [vmem:[%s1 + $0x2c] sm:$0xf]
        %v247 = vld [vmem:[%s1 + $0x30] sm:$0xf]
        %v248 = vld [vmem:[%s1 + $0x34] sm:$0xf]
        %v249 = vld [vmem:[%s1 + $0x38] sm:$0xf]
        %v250 = vld [vmem:[%s1 + $0x3c] sm:$0xf]
        %v283 = vunpack.c.l.b16 %v203
        %v284 = vunpack.c.l.b16 %v204
        %v285 = vunpack.c.l.b16 %v205
        %v286 = vunpack.c.l.b16 %v206
        %v287 = vunpack.c.l.b16 %v207
        %v288 = vunpack.c.l.b16 %v208
        %v289 = vunpack.c.l.b16 %v209
        %v290 = vunpack.c.l.b16 %v210
        %v291 = vunpack.c.l.b16 %v211
        %v292 = vunpack.c.l.b16 %v212
        %v293 = vunpack.c.l.b16 %v213
        %v294 = vunpack.c.l.b16 %v214
        %v295 = vunpack.c.l.b16 %v215
        %v296 = vunpack.c.l.b16 %v216
        %v297 = vunpack.c.l.b16 %v217
        %v298 = vunpack.c.l.b16 %v218
        %v299 = vunpack.c.l.b16 %v219
        %v300 = vunpack.c.l.b16 %v220
        %v301 = vunpack.c.l.b16 %v221
        %v302 = vunpack.c.l.b16 %v222
        %v303 = vunpack.c.l.b16 %v223
        %v304 = vunpack.c.l.b16 %v224
        %v305 = vunpack.c.l.b16 %v225
        %v306 = vunpack.c.l.b16 %v226
        %v307 = vunpack.c.l.b16 %v227
        %v308 = vunpack.c.l.b16 %v228
        %v309 = vunpack.c.l.b16 %v229
        %v310 = vunpack.c.l.b16 %v230
        %v311 = vunpack.c.l.b16 %v231
        %v312 = vunpack.c.l.b16 %v232
        %v313 = vunpack.c.l.b16 %v233
        %v314 = vunpack.c.l.b16 %v234
        %v315 = vpack.c.b16 %v284, %v283
        %v316 = vpack.c.b16 %v286, %v285
        %v317 = vpack.c.b16 %v288, %v287
        %v318 = vpack.c.b16 %v290, %v289
        %v319 = vpack.c.b16 %v292, %v291
        %v320 = vpack.c.b16 %v294, %v293
        %v321 = vpack.c.b16 %v296, %v295
        %v322 = vpack.c.b16 %v298, %v297
        %v323 = vpack.c.b16 %v300, %v299
        %v324 = vpack.c.b16 %v302, %v301
        %v325 = vpack.c.b16 %v304, %v303
        %v326 = vpack.c.b16 %v306, %v305
        %v327 = vpack.c.b16 %v308, %v307
        %v328 = vpack.c.b16 %v310, %v309
        %v329 = vpack.c.b16 %v312, %v311
        %v330 = vpack.c.b16 %v314, %v313
        %v363 = vunpack.c.l.b16 %v235
        %v364 = vunpack.c.l.b16 %v236
        %v365 = vunpack.c.l.b16 %v237
        %v366 = vunpack.c.l.b16 %v238
        %v367 = vunpack.c.l.b16 %v239
        %v368 = vunpack.c.l.b16 %v240
        %v369 = vunpack.c.l.b16 %v241
        %v370 = vunpack.c.l.b16 %v242
        %v371 = vunpack.c.l.b16 %v243
        %v372 = vunpack.c.l.b16 %v244
        %v373 = vunpack.c.l.b16 %v245
        %v374 = vunpack.c.l.b16 %v246
        %v375 = vunpack.c.l.b16 %v247
        %v376 = vunpack.c.l.b16 %v248
        %v377 = vunpack.c.l.b16 %v249
        %v378 = vunpack.c.l.b16 %v250
        %v379 = vpack.c.b16 %v364, %v363
        %v380 = vpack.c.b16 %v366, %v365
        %v381 = vpack.c.b16 %v368, %v367
        %v382 = vpack.c.b16 %v370, %v369
        %v383 = vpack.c.b16 %v372, %v371
        %v384 = vpack.c.b16 %v374, %v373
        %v385 = vpack.c.b16 %v376, %v375
        %v386 = vpack.c.b16 %v378, %v377
        %395 = vmatprep.subr.bf16.mxu0 0
        %396 = vmatpush1.bf16.msra.mxu0 %v379
        %397 = vmatprep.subr.bf16.mxu0 0
        %398 = vmatpush1.bf16.msra.mxu0 %v380
        %399 = vmatprep.subr.bf16.mxu0 0
        %400 = vmatpush1.bf16.msra.mxu0 %v381
        %401 = vmatprep.subr.bf16.mxu0 0
        %402 = vmatpush1.bf16.msra.mxu0 %v382
        %403 = vmatprep.subr.bf16.mxu0 0
        %404 = vmatpush1.bf16.msra.mxu0 %v383
        %405 = vmatprep.subr.bf16.mxu0 0
        %406 = vmatpush1.bf16.msra.mxu0 %v384
        %407 = vmatprep.subr.bf16.mxu0 0
        %408 = vmatpush1.bf16.msra.mxu0 %v385
        %409 = vmatprep.subr.bf16.mxu0 0
        %410 = vmatpush1.bf16.msra.mxu0 %v386
        %411 = vmatprep.subr.bf16.mxu0 0
        %412 = vmatpush1.bf16.msra.mxu0 0
        %413 = vmatprep.subr.bf16.mxu0 0
        %414 = vmatpush1.bf16.msra.mxu0 0
        %415 = vmatprep.subr.bf16.mxu0 0
        %416 = vmatpush1.bf16.msra.mxu0 0
        %417 = vmatprep.subr.bf16.mxu0 0
        %418 = vmatpush1.bf16.msra.mxu0 0
        %419 = vmatprep.subr.bf16.mxu0 0
        %420 = vmatpush1.bf16.msra.mxu0 0
        %421 = vmatprep.subr.bf16.mxu0 0
        %422 = vmatpush1.bf16.msra.mxu0 0
        %423 = vmatprep.subr.bf16.mxu0 0
        %424 = vmatpush1.bf16.msra.mxu0 0
        %425 = vmatprep.subr.bf16.mxu0 0
        %426 = vmatpush1.bf16.msra.mxu0 0
        %427 = vmatprep.mubr.bf16.mxu0 0
        %428 = vmatmul.mubr.bf16.gmra.mrb[0].mxu0 %v315
        %v429 = vpop.f32.mrb[0].mxu0
        %v430 = vadd.f32 0.0, %v429
        %v431 = vpop.f32.mrb[0].mxu0
        %v432 = vpop.f32.mrb[0].mxu0
        %v433 = vadd.f32 0.0, %v432
        %v434 = vpop.f32.mrb[0].mxu0
        %435 = vmatprep.mubr.bf16.mxu0 0
        %436 = vmatmul.mubr.bf16.gmra.mrb[0].mxu0 %v316
        %v437 = vpop.f32.mrb[0].mxu0
        %v438 = vadd.f32 0.0, %v437
        %v439 = vpop.f32.mrb[0].mxu0
        %v440 = vpop.f32.mrb[0].mxu0
        %v441 = vadd.f32 0.0, %v440
        %v442 = vpop.f32.mrb[0].mxu0
        %443 = vmatprep.mubr.bf16.mxu0 0
        %444 = vmatmul.mubr.bf16.gmra.mrb[0].mxu0 %v317
        %v445 = vpop.f32.mrb[0].mxu0
        %v446 = vadd.f32 0.0, %v445
        %v447 = vpop.f32.mrb[0].mxu0
        %v448 = vpop.f32.mrb[0].mxu0
        %v449 = vadd.f32 0.0, %v448
        %v450 = vpop.f32.mrb[0].mxu0
        %451 = vmatprep.mubr.bf16.mxu0 0
        %452 = vmatmul.mubr.bf16.gmra.mrb[0].mxu0 %v318
        %v453 = vpop.f32.mrb[0].mxu0
        %v454 = vadd.f32 0.0, %v453
        %v455 = vpop.f32.mrb[0].mxu0
        %v456 = vpop.f32.mrb[0].mxu0
        %v457 = vadd.f32 0.0, %v456
        %v458 = vpop.f32.mrb[0].mxu0
        %459 = vmatprep.mubr.bf16.mxu0 0
        %460 = vmatmul.mubr.bf16.gmra.mrb[0].mxu0 %v319
        %v461 = vpop.f32.mrb[0].mxu0
        %v462 = vadd.f32 0.0, %v461
        %v463 = vpop.f32.mrb[0].mxu0
        %v464 = vpop.f32.mrb[0].mxu0
        %v465 = vadd.f32 0.0, %v464
        %v466 = vpop.f32.mrb[0].mxu0
        %467 = vmatprep.mubr.bf16.mxu0 0
        %468 = vmatmul.mubr.bf16.gmra.mrb[0].mxu0 %v320
        %v469 = vpop.f32.mrb[0].mxu0
        %v470 = vadd.f32 0.0, %v469
        %v471 = vpop.f32.mrb[0].mxu0
        %v472 = vpop.f32.mrb[0].mxu0
        %v473 = vadd.f32 0.0, %v472
        %v474 = vpop.f32.mrb[0].mxu0
        %475 = vmatprep.mubr.bf16.mxu0 0
        %476 = vmatmul.mubr.bf16.gmra.mrb[0].mxu0 %v321
        %v477 = vpop.f32.mrb[0].mxu0
        %v478 = vadd.f32 0.0, %v477
        %v479 = vpop.f32.mrb[0].mxu0
        %v480 = vpop.f32.mrb[0].mxu0
        %v481 = vadd.f32 0.0, %v480
        %v482 = vpop.f32.mrb[0].mxu0
        %483 = vmatprep.mubr.bf16.mxu0 0
        %484 = vmatmul.mubr.bf16.gmra.mrb[0].mxu0 %v322
        %v485 = vpop.f32.mrb[0].mxu0
        %v486 = vadd.f32 0.0, %v485
        %v487 = vpop.f32.mrb[0].mxu0
        %v488 = vpop.f32.mrb[0].mxu0
        %v489 = vadd.f32 0.0, %v488
        %v490 = vpop.f32.mrb[0].mxu0
        %491 = vmatprep.mubr.bf16.mxu0 0
        %492 = vmatmul.mubr.bf16.gmra.mrb[0].mxu0 %v323
        %v493 = vpop.f32.mrb[0].mxu0
        %v494 = vadd.f32 0.0, %v493
        %v495 = vpop.f32.mrb[0].mxu0
        %v496 = vpop.f32.mrb[0].mxu0
        %v497 = vadd.f32 0.0, %v496
        %v498 = vpop.f32.mrb[0].mxu0
        %499 = vmatprep.mubr.bf16.mxu0 0
        %500 = vmatmul.mubr.bf16.gmra.mrb[0].mxu0 %v324
        %v501 = vpop.f32.mrb[0].mxu0
        %v502 = vadd.f32 0.0, %v501
        %v503 = vpop.f32.mrb[0].mxu0
        %v504 = vpop.f32.mrb[0].mxu0
        %v505 = vadd.f32 0.0, %v504
        %v506 = vpop.f32.mrb[0].mxu0
        %507 = vmatprep.mubr.bf16.mxu0 0
        %508 = vmatmul.mubr.bf16.gmra.mrb[0].mxu0 %v325
        %v509 = vpop.f32.mrb[0].mxu0
        %v510 = vadd.f32 0.0, %v509
        %v511 = vpop.f32.mrb[0].mxu0
        %v512 = vpop.f32.mrb[0].mxu0
        %v513 = vadd.f32 0.0, %v512
        %v514 = vpop.f32.mrb[0].mxu0
        %515 = vmatprep.mubr.bf16.mxu0 0
        %516 = vmatmul.mubr.bf16.gmra.mrb[0].mxu0 %v326
        %v517 = vpop.f32.mrb[0].mxu0
        %v518 = vadd.f32 0.0, %v517
        %v519 = vpop.f32.mrb[0].mxu0
        %v520 = vpop.f32.mrb[0].mxu0
        %v521 = vadd.f32 0.0, %v520
        %v522 = vpop.f32.mrb[0].mxu0
        %523 = vmatprep.mubr.bf16.mxu0 0
        %524 = vmatmul.mubr.bf16.gmra.mrb[0].mxu0 %v327
        %v525 = vpop.f32.mrb[0].mxu0
        %v526 = vadd.f32 0.0, %v525
        %v527 = vpop.f32.mrb[0].mxu0
        %v528 = vpop.f32.mrb[0].mxu0
        %v529 = vadd.f32 0.0, %v528
        %v530 = vpop.f32.mrb[0].mxu0
        %531 = vmatprep.mubr.bf16.mxu0 0
        %532 = vmatmul.mubr.bf16.gmra.mrb[0].mxu0 %v328
        %v533 = vpop.f32.mrb[0].mxu0
        %v534 = vadd.f32 0.0, %v533
        %v535 = vpop.f32.mrb[0].mxu0
        %v536 = vpop.f32.mrb[0].mxu0
        %v537 = vadd.f32 0.0, %v536
        %v538 = vpop.f32.mrb[0].mxu0
        %539 = vmatprep.mubr.bf16.mxu0 0
        %540 = vmatmul.mubr.bf16.gmra.mrb[0].mxu0 %v329
        %v541 = vpop.f32.mrb[0].mxu0
        %v542 = vadd.f32 0.0, %v541
        %v543 = vpop.f32.mrb[0].mxu0
        %v544 = vpop.f32.mrb[0].mxu0
        %v545 = vadd.f32 0.0, %v544
        %v546 = vpop.f32.mrb[0].mxu0
        %547 = vmatprep.mubr.bf16.mxu0 0
        %548 = vmatmul.mubr.bf16.gmra.mrb[0].mxu0 %v330
        %v549 = vpop.f32.mrb[0].mxu0
        %v550 = vadd.f32 0.0, %v549
        %v551 = vpop.f32.mrb[0].mxu0
        %v552 = vpop.f32.mrb[0].mxu0
        %v553 = vadd.f32 0.0, %v552
        %v554 = vpop.f32.mrb[0].mxu0
        %555 = vdwg.mxu0
        %vm556 = vcmask 523264
        %557 = vst.msk [vmem:[%s189] sm:$0xff] %vm556, %v430
        %558 = vst.msk [vmem:[%s189 + $0x8] sm:$0xff] %vm556, %v433
        %559 = vst.msk [vmem:[%s189 + $0x10] sm:$0xff] %vm556, %v438
        %560 = vst.msk [vmem:[%s189 + $0x18] sm:$0xff] %vm556, %v441
        %561 = vst.msk [vmem:[%s189 + $0x20] sm:$0xff] %vm556, %v446
        %562 = vst.msk [vmem:[%s189 + $0x28] sm:$0xff] %vm556, %v449
        %563 = vst.msk [vmem:[%s189 + $0x30] sm:$0xff] %vm556, %v454
        %564 = vst.msk [vmem:[%s189 + $0x38] sm:$0xff] %vm556, %v457
        %565 = vst.msk [vmem:[%s189 + $0x40] sm:$0xff] %vm556, %v462
        %566 = vst.msk [vmem:[%s189 + $0x48] sm:$0xff] %vm556, %v465
        %567 = vst.msk [vmem:[%s189 + $0x50] sm:$0xff] %vm556, %v470
        %568 = vst.msk [vmem:[%s189 + $0x58] sm:$0xff] %vm556, %v473
        %569 = vst.msk [vmem:[%s189 + $0x60] sm:$0xff] %vm556, %v478
        %570 = vst.msk [vmem:[%s189 + $0x68] sm:$0xff] %vm556, %v481
        %571 = vst.msk [vmem:[%s189 + $0x70] sm:$0xff] %vm556, %v486
        %572 = vst.msk [vmem:[%s189 + $0x78] sm:$0xff] %vm556, %v489
        %573 = vst.msk [vmem:[%s189 + $0x80] sm:$0xff] %vm556, %v494
        %574 = vst.msk [vmem:[%s189 + $0x88] sm:$0xff] %vm556, %v497
        %575 = vst.msk [vmem:[%s189 + $0x90] sm:$0xff] %vm556, %v502
        %576 = vst.msk [vmem:[%s189 + $0x98] sm:$0xff] %vm556, %v505
        %577 = vst.msk [vmem:[%s189 + $0xa0] sm:$0xff] %vm556, %v510
        %578 = vst.msk [vmem:[%s189 + $0xa8] sm:$0xff] %vm556, %v513
        %579 = vst.msk [vmem:[%s189 + $0xb0] sm:$0xff] %vm556, %v518
        %580 = vst.msk [vmem:[%s189 + $0xb8] sm:$0xff] %vm556, %v521
        %581 = vst.msk [vmem:[%s189 + $0xc0] sm:$0xff] %vm556, %v526
        %582 = vst.msk [vmem:[%s189 + $0xc8] sm:$0xff] %vm556, %v529
        %583 = vst.msk [vmem:[%s189 + $0xd0] sm:$0xff] %vm556, %v534
        %584 = vst.msk [vmem:[%s189 + $0xd8] sm:$0xff] %vm556, %v537
        %585 = vst.msk [vmem:[%s189 + $0xe0] sm:$0xff] %vm556, %v542
        %586 = vst.msk [vmem:[%s189 + $0xe8] sm:$0xff] %vm556, %v545
        %587 = vst.msk [vmem:[%s189 + $0xf0] sm:$0xff] %vm556, %v550
        %588 = vst.msk [vmem:[%s189 + $0xf8] sm:$0xff] %vm556, %v553
        %v589 = vsel %vm556, %v430, 0.0
        %v590 = vsel %vm556, %v433, 0.0
        %v591 = vadd.f32 %v589, %v590
        %v592 = vsel %vm556, %v438, 0.0
        %v593 = vadd.f32 %v591, %v592
        %v594 = vsel %vm556, %v441, 0.0
        %v595 = vadd.f32 %v593, %v594
        %v596 = vsel %vm556, %v446, 0.0
        %v597 = vadd.f32 %v595, %v596
        %v598 = vsel %vm556, %v449, 0.0
        %v599 = vadd.f32 %v597, %v598
        %v600 = vsel %vm556, %v454, 0.0
        %v601 = vadd.f32 %v599, %v600
        %v602 = vsel %vm556, %v457, 0.0
        %v603 = vadd.f32 %v601, %v602
        %v604 = vsel %vm556, %v462, 0.0
        %v605 = vadd.f32 %v603, %v604
        %v606 = vsel %vm556, %v465, 0.0
        %v607 = vadd.f32 %v605, %v606
        %v608 = vsel %vm556, %v470, 0.0
        %v609 = vadd.f32 %v607, %v608
        %v610 = vsel %vm556, %v473, 0.0
        %v611 = vadd.f32 %v609, %v610
        %v612 = vsel %vm556, %v478, 0.0
        %v613 = vadd.f32 %v611, %v612
        %v614 = vsel %vm556, %v481, 0.0
        %v615 = vadd.f32 %v613, %v614
        %v616 = vsel %vm556, %v486, 0.0
        %v617 = vadd.f32 %v615, %v616
        %v618 = vsel %vm556, %v489, 0.0
        %v619 = vadd.f32 %v617, %v618
        %v620 = vsel %vm556, %v494, 0.0
        %v621 = vadd.f32 %v619, %v620
        %v622 = vsel %vm556, %v497, 0.0
        %v623 = vadd.f32 %v621, %v622
        %v624 = vsel %vm556, %v502, 0.0
        %v625 = vadd.f32 %v623, %v624
        %v626 = vsel %vm556, %v505, 0.0
        %v627 = vadd.f32 %v625, %v626
        %v628 = vsel %vm556, %v510, 0.0
        %v629 = vadd.f32 %v627, %v628
        %v630 = vsel %vm556, %v513, 0.0
        %v631 = vadd.f32 %v629, %v630
        %v632 = vsel %vm556, %v518, 0.0
        %v633 = vadd.f32 %v631, %v632
        %v634 = vsel %vm556, %v521, 0.0
        %v635 = vadd.f32 %v633, %v634
        %v636 = vsel %vm556, %v526, 0.0
        %v637 = vadd.f32 %v635, %v636
        %v638 = vsel %vm556, %v529, 0.0
        %v639 = vadd.f32 %v637, %v638
        %v640 = vsel %vm556, %v534, 0.0
        %v641 = vadd.f32 %v639, %v640
        %v642 = vsel %vm556, %v537, 0.0
        %v643 = vadd.f32 %v641, %v642
        %v644 = vsel %vm556, %v542, 0.0
        %v645 = vadd.f32 %v643, %v644
        %v646 = vsel %vm556, %v545, 0.0
        %v647 = vadd.f32 %v645, %v646
        %v648 = vsel %vm556, %v550, 0.0
        %v649 = vadd.f32 %v647, %v648
        %v650 = vsel %vm556, %v553, 0.0
        %v651 = vadd.f32 %v649, %v650
        %v652 = vrot.slane %v651, 4
        %v653 = vadd.f32 %v651, %v652
        %v654 = vrot.slane %v653, 2
        %v655 = vadd.f32 %v653, %v654
        %v656 = vrot.slane %v655, 1
        %v657 = vadd.f32 %v655, %v656
        %v658 = vmul.f32 %v430, %v430
        %v659 = vmul.f32 %v433, %v433
        %v660 = vmul.f32 %v438, %v438
        %v661 = vmul.f32 %v441, %v441
        %v662 = vmul.f32 %v446, %v446
        %v663 = vmul.f32 %v449, %v449
        %v664 = vmul.f32 %v454, %v454
        %v665 = vmul.f32 %v457, %v457
        %v666 = vmul.f32 %v462, %v462
        %v667 = vmul.f32 %v465, %v465
        %v668 = vmul.f32 %v470, %v470
        %v669 = vmul.f32 %v473, %v473
        %v670 = vmul.f32 %v478, %v478
        %v671 = vmul.f32 %v481, %v481
        %v672 = vmul.f32 %v486, %v486
        %v673 = vmul.f32 %v489, %v489
        %v674 = vmul.f32 %v494, %v494
        %v675 = vmul.f32 %v497, %v497
        %v676 = vmul.f32 %v502, %v502
        %v677 = vmul.f32 %v505, %v505
        %v678 = vmul.f32 %v510, %v510
        %v679 = vmul.f32 %v513, %v513
        %v680 = vmul.f32 %v518, %v518
        %v681 = vmul.f32 %v521, %v521
        %v682 = vmul.f32 %v526, %v526
        %v683 = vmul.f32 %v529, %v529
        %v684 = vmul.f32 %v534, %v534
        %v685 = vmul.f32 %v537, %v537
        %v686 = vmul.f32 %v542, %v542
        %v687 = vmul.f32 %v545, %v545
        %v688 = vmul.f32 %v550, %v550
        %v689 = vmul.f32 %v553, %v553
        %v690 = vsel %vm556, %v658, 0.0
        %v691 = vsel %vm556, %v659, 0.0
        %v692 = vadd.f32 %v690, %v691
        %v693 = vsel %vm556, %v660, 0.0
        %v694 = vadd.f32 %v692, %v693
        %v695 = vsel %vm556, %v661, 0.0
        %v696 = vadd.f32 %v694, %v695
        %v697 = vsel %vm556, %v662, 0.0
        %v698 = vadd.f32 %v696, %v697
        %v699 = vsel %vm556, %v663, 0.0
        %v700 = vadd.f32 %v698, %v699
        %v701 = vsel %vm556, %v664, 0.0
        %v702 = vadd.f32 %v700, %v701
        %v703 = vsel %vm556, %v665, 0.0
        %v704 = vadd.f32 %v702, %v703
        %v705 = vsel %vm556, %v666, 0.0
        %v706 = vadd.f32 %v704, %v705
        %v707 = vsel %vm556, %v667, 0.0
        %v708 = vadd.f32 %v706, %v707
        %v709 = vsel %vm556, %v668, 0.0
        %v710 = vadd.f32 %v708, %v709
        %v711 = vsel %vm556, %v669, 0.0
        %v712 = vadd.f32 %v710, %v711
        %v713 = vsel %vm556, %v670, 0.0
        %v714 = vadd.f32 %v712, %v713
        %v715 = vsel %vm556, %v671, 0.0
        %v716 = vadd.f32 %v714, %v715
        %v717 = vsel %vm556, %v672, 0.0
        %v718 = vadd.f32 %v716, %v717
        %v719 = vsel %vm556, %v673, 0.0
        %v720 = vadd.f32 %v718, %v719
        %v721 = vsel %vm556, %v674, 0.0
        %v722 = vadd.f32 %v720, %v721
        %v723 = vsel %vm556, %v675, 0.0
        %v724 = vadd.f32 %v722, %v723
        %v725 = vsel %vm556, %v676, 0.0
        %v726 = vadd.f32 %v724, %v725
        %v727 = vsel %vm556, %v677, 0.0
        %v728 = vadd.f32 %v726, %v727
        %v729 = vsel %vm556, %v678, 0.0
        %v730 = vadd.f32 %v728, %v729
        %v731 = vsel %vm556, %v679, 0.0
        %v732 = vadd.f32 %v730, %v731
        %v733 = vsel %vm556, %v680, 0.0
        %v734 = vadd.f32 %v732, %v733
        %v735 = vsel %vm556, %v681, 0.0
        %v736 = vadd.f32 %v734, %v735
        %v737 = vsel %vm556, %v682, 0.0
        %v738 = vadd.f32 %v736, %v737
        %v739 = vsel %vm556, %v683, 0.0
        %v740 = vadd.f32 %v738, %v739
        %v741 = vsel %vm556, %v684, 0.0
        %v742 = vadd.f32 %v740, %v741
        %v743 = vsel %vm556, %v685, 0.0
        %v744 = vadd.f32 %v742, %v743
        %v745 = vsel %vm556, %v686, 0.0
        %v746 = vadd.f32 %v744, %v745
        %v747 = vsel %vm556, %v687, 0.0
        %v748 = vadd.f32 %v746, %v747
        %v749 = vsel %vm556, %v688, 0.0
        %v750 = vadd.f32 %v748, %v749
        %v751 = vsel %vm556, %v689, 0.0
        %v752 = vadd.f32 %v750, %v751
        %v753 = vrot.slane %v752, 4
        %v754 = vadd.f32 %v752, %v753
        %v755 = vrot.slane %v754, 2
        %v756 = vadd.f32 %v754, %v755
        %v757 = vrot.slane %v756, 1
        %v758 = vadd.f32 %v756, %v757
        %v759 = vlaneseq
        %v760 = vshrl.u32 %v759, 7
        %vm761 = vcmp.eq.s32.totalorder %v760, 0
        %vm762 = vcmp.eq.s32.totalorder %v760, 1
        %v763 = vsel %vm762, %v758, 0.0
        %v764 = vsel %vm761, %v657, %v763
        %765 = vst.msk [vmem:[%s201] sm:$0xff] %vm556, %v764
        %s766 = sand.u32 %s76, 1
        %s767 = scalar_lea.sflag [#allocation4], %s766
        %s768 = sand.u32 %s76, 1
        %s769 = smul.addr %s768, 256
        %s770 = scalar_lea.vmem [#allocation5], %s769
        %p771 = scmp.lt.s32.totalorder %s21, 303
        %s772 = scalar_select %p771, %s21, 303
        %s773 = smul.addr %s772, 8
        %s774 = scalar_lea.vmem %s3, %s773
        // Predicated region
        $region33: #{conv_bn.2} parent=27 // pred_check
          %p775 = pneg %p86
        $region34: #{conv_bn.2} parent=27 // pred_check_branch
          %777 = sbr.rel (%p775) target = $region36
        $region35: #{conv_bn.2} parent=27 // pred_region
          %s778 = smul.u32 32, %s21
          %s780 = ssub.s32 4096, 4096
          %781 = vsyncadd %s767, %s780
          %s782 = smul.addr %s778, 128
          %s783 = scalar_lea.hbm %s2, %s782
          %s784 = sshll.u32 %s770, 4
          %s785 = int_to_ptr.vmem [resolvable:$true] %s784
          %790 = dma.vmem_to_hbm [thread:$0]  %s785, 4096, %s783, %s767, 128, 128, 8
        $region36: #{conv_bn.2} parent=27 // pred_fallthru
          _
        // Predicated region
        $region37: #{conv_bn.2} parent=27 // pred_check
          %p791 = pneg %p112
        $region38: #{conv_bn.2} parent=27 // pred_check_branch
          %793 = sbr.rel (%p791) target = $region40
        $region39: #{conv_bn.2} parent=27 // pred_region
          _
        $region40: #{conv_bn.2} parent=27 // pred_fallthru
          _
      $region28: #{conv_bn.2} parent=5 // pred_fallthru
        _
      %p794 = scmp.le.s32.totalorder 2, %s16
      // Predicated region
      $region41: #{conv_bn.2} parent=5 // pred_check
        %p795 = pneg %p794
      $region42: #{conv_bn.2} parent=5 // pred_check_branch
        %797 = sbr.rel (%p795) target = $region44
      $region43: #{conv_bn.2} parent=5 // pred_region
        %s798 = ssub.s32 %s16, 2
        // Predicated region
        $region45: #{conv_bn.2} parent=43 // pred_check
          %p799 = pneg %p92
        $region46: #{conv_bn.2} parent=43 // pred_check_branch
          %801 = sbr.rel (%p799) target = $region48
        $region47: #{conv_bn.2} parent=43 // pred_region
          %s802 = sand.u32 %s77, 1
          %s803 = scalar_lea.sflag [#allocation4], %s802
          %s804 = sand.u32 %s77, 1
          %s805 = smul.addr %s804, 256
          %s806 = scalar_lea.vmem [#allocation5], %s805
          %807 = dma.done %s803, 4096
        $region48: #{conv_bn.2} parent=43 // pred_fallthru
          _
        // Predicated region
        $region49: #{conv_bn.2} parent=43 // pred_check
          %p808 = pneg %p118
        $region50: #{conv_bn.2} parent=43 // pred_check_branch
          %810 = sbr.rel (%p808) target = $region52
        $region51: #{conv_bn.2} parent=43 // pred_region
          %p811 = scmp.lt.s32.totalorder %s22, 303
          %s812 = scalar_select %p811, %s22, 303
          %s813 = smul.addr %s812, 8
          %s814 = scalar_lea.vmem %s3, %s813
        $region52: #{conv_bn.2} parent=43 // pred_fallthru
          _
      $region44: #{conv_bn.2} parent=5 // pred_fallthru
        _
    $region6: #{conv_bn.2} parent=1 // loop_footer
      %s20 = sadd.s32 1, %s16
    $region7: #{conv_bn.2} parent=1 // loop_footer_branch
      %15 = sbr.rel target = $region3
    $region8: #{conv_bn.2} parent=1 // loop_exit
      _
    %815 = vsyncpa [#allocation3], 1
    %s816 = scalar_lea.sflag [#allocation3], 1
    %817 = vsyncpa %s816, 1
    %818 = vsyncpa [#allocation4], 1
    %s819 = scalar_lea.sflag [#allocation4], 1
    %820 = vsyncpa %s819, 1

// kernel: conv_bn.3
$region0: #{conv_bn.3}
  #allocation0 [shape = 'u32[]', space=smem, size = 0x4, offset = 0x4, fixed_abs, tag = 'smem constant byte address 0x4 - core index']
  #allocation1 [shape = 'u32[144,128]{1,0:T(1,128)}', space=vmem, size = 0x12000, scoped, tag = 'internal scratch']
  %s0 = inlined_call_operand.vmem [shape: f32[38912,128], index: 0, kind: input, shape index: {}]
  %s1 = inlined_call_operand.vmem [shape: f32[1,128], index: 1, kind: input, shape index: {}]
  %s2 = inlined_call_operand.vmem [shape: f32[1,128], index: 2, kind: input, shape index: {}]
  %s3 = inlined_call_operand.hbm [shape: f32[38912,128], index: 3, kind: output, shape index: {}]
  %s4 = sld [smem:[#allocation0]]
  $region45: #{conv_bn.3} parent=0
    _
  %s6 = ssub.s32 1, %s4
  %s7 = scalar_select 0, %s6, %s4
  $region1: #{conv_bn.3} parent=0
    #allocation2 [shape = 'u8[2097152]{0}', space=vmem, size = 0x200000, scoped, tag = 'output window, operand 0']
    #allocation3 [shape = 's32[2]{0}', space=sflag, size = 0x8, scoped, tag = 'scoped memory for conv_bn.3']
    %8 = vsyncpa [#allocation3], 0
    %s9 = scalar_lea.sflag [#allocation3], 1
    %10 = vsyncpa %s9, 0
    loop: start=0, step=1, limit=21
    $region2: #{conv_bn.3} parent=1 // loop_pre_header
      _
    $region3: #{conv_bn.3} parent=1 // loop_header
      %s12 = sphi 0, %s16
      %p13 = scmp.ge.s32.totalorder %s12, 21
      %s22 = sphi 0, %s24
      %s25 = sphi 0, %s22
      %s26 = sphi 0, %s25
      %s42 = sphi 0, %s26
      %s46 = sphi 0, %s46
      %s48 = sphi 0, %s46
      %s49 = sphi 0, %s48
      %s63 = sphi 0, %s49
      %s67 = sphi 0, %s67
      %s69 = sphi 0, %s67
      %s70 = sphi 0, %s69
      %s84 = sphi 0, %s70
      %s90 = sphi 0, %s92
      %s93 = sphi 0, %s90
      %s94 = sphi 0, %s93
      %s110 = sphi 0, %s94
    $region4: #{conv_bn.3} parent=1 // loop_header_branch
      %15 = sbr.rel (%p13) target = $region8
    $region5: #{conv_bn.3} parent=1 // loop_body
      %s17 = ssub.s32 %s12, 1
      %s18 = ssub.s32 %s12, 2
      %s19 = sadd.s32 %s12, 1
      %s20 = ssub.s32 %s12, %s19
      %p21 = scmp.eq.s32.totalorder %s20, 0
      %s23 = sadd.s32 %s22, 1
      %s24 = scalar_select %p21, %s22, %s23
      %p27 = pneg %p21
      %p28 = scmp.eq.s32.totalorder %s12, 18
      %p29 = por %p27, %p28
      %p30 = scmp.ne.s32.totalorder %s22, %s25
      %p31 = scmp.eq.s32.totalorder %s12, 0
      %p32 = por %p30, %p31
      %p33 = scmp.ne.s32.totalorder %s22, %s25
      %p34 = scmp.eq.s32.totalorder %s17, 18
      %p35 = por %p33, %p34
      %p36 = scmp.ne.s32.totalorder %s25, %s26
      %p37 = scmp.eq.s32.totalorder %s17, 0
      %p38 = por %p36, %p37
      %p39 = scmp.ne.s32.totalorder %s25, %s26
      %p40 = scmp.eq.s32.totalorder %s18, 18
      %p41 = por %p39, %p40
      %p43 = scmp.ne.s32.totalorder %s26, %s42
      %p44 = scmp.eq.s32.totalorder %s18, 0
      %p45 = por %p43, %p44
      %s47 = sadd.s32 %s46, 1
      %p50 = scmp.eq.s32.totalorder %s12, 18
      %p51 = scmp.ne.s32.totalorder %s46, %s48
      %p52 = scmp.eq.s32.totalorder %s12, 0
      %p53 = por %p51, %p52
      %p54 = scmp.ne.s32.totalorder %s46, %s48
      %p55 = scmp.eq.s32.totalorder %s17, 18
      %p56 = por %p54, %p55
      %p57 = scmp.ne.s32.totalorder %s48, %s49
      %p58 = scmp.eq.s32.totalorder %s17, 0
      %p59 = por %p57, %p58
      %p60 = scmp.ne.s32.totalorder %s48, %s49
      %p61 = scmp.eq.s32.totalorder %s18, 18
      %p62 = por %p60, %p61
      %p64 = scmp.ne.s32.totalorder %s49, %s63
      %p65 = scmp.eq.s32.totalorder %s18, 0
      %p66 = por %p64, %p65
      %s68 = sadd.s32 %s67, 1
      %p71 = scmp.eq.s32.totalorder %s12, 18
      %p72 = scmp.ne.s32.totalorder %s67, %s69
      %p73 = scmp.eq.s32.totalorder %s12, 0
      %p74 = por %p72, %p73
      %p75 = scmp.ne.s32.totalorder %s67, %s69
      %p76 = scmp.eq.s32.totalorder %s17, 18
      %p77 = por %p75, %p76
      %p78 = scmp.ne.s32.totalorder %s69, %s70
      %p79 = scmp.eq.s32.totalorder %s17, 0
      %p80 = por %p78, %p79
      %p81 = scmp.ne.s32.totalorder %s69, %s70
      %p82 = scmp.eq.s32.totalorder %s18, 18
      %p83 = por %p81, %p82
      %p85 = scmp.ne.s32.totalorder %s70, %s84
      %p86 = scmp.eq.s32.totalorder %s18, 0
      %p87 = por %p85, %p86
      %s88 = ssub.s32 %s12, %s19
      %p89 = scmp.eq.s32.totalorder %s88, 0
      %s91 = sadd.s32 %s90, 1
      %s92 = scalar_select %p89, %s90, %s91
      %p95 = pneg %p89
      %p96 = scmp.eq.s32.totalorder %s12, 18
      %p97 = por %p95, %p96
      %p98 = scmp.ne.s32.totalorder %s90, %s93
      %p99 = scmp.eq.s32.totalorder %s12, 0
      %p100 = por %p98, %p99
      %p101 = scmp.ne.s32.totalorder %s90, %s93
      %p102 = scmp.eq.s32.totalorder %s17, 18
      %p103 = por %p101, %p102
      %p104 = scmp.ne.s32.totalorder %s93, %s94
      %p105 = scmp.eq.s32.totalorder %s17, 0
      %p106 = por %p104, %p105
      %p107 = scmp.ne.s32.totalorder %s93, %s94
      %p108 = scmp.eq.s32.totalorder %s18, 18
      %p109 = por %p107, %p108
      %p111 = scmp.ne.s32.totalorder %s94, %s110
      %p112 = scmp.eq.s32.totalorder %s18, 0
      %p113 = por %p111, %p112
      %p114 = scmp.le.s32.totalorder 1, %s12
      %p115 = scmp.lt.s32.totalorder %s12, 20
      %p116 = pnand %p114, %p115
      %p117 = pneg %p116
      // Predicated region
      $region9: #{conv_bn.3} parent=5 // pred_check
        _
      $region10: #{conv_bn.3} parent=5 // pred_check_branch
        %119 = sbr.rel (%p116) target = $region12
      $region11: #{conv_bn.3} parent=5 // pred_region
        %s120 = ssub.s32 %s12, 1
        // Predicated region
        $region13: #{conv_bn.3} parent=11 // pred_check
          %p121 = pneg %p59
        $region14: #{conv_bn.3} parent=11 // pred_check_branch
          %123 = sbr.rel (%p121) target = $region16
        $region15: #{conv_bn.3} parent=11 // pred_region
          _
        $region16: #{conv_bn.3} parent=11 // pred_fallthru
          _
        // Predicated region
        $region17: #{conv_bn.3} parent=11 // pred_check
          %p124 = pneg %p80
        $region18: #{conv_bn.3} parent=11 // pred_check_branch
          %126 = sbr.rel (%p124) target = $region20
        $region19: #{conv_bn.3} parent=11 // pred_region
          _
        $region20: #{conv_bn.3} parent=11 // pred_fallthru
          _
      $region12: #{conv_bn.3} parent=5 // pred_fallthru
        _
      %p127 = scmp.lt.s32.totalorder %s12, 19
      // Predicated region
      $region21: #{conv_bn.3} parent=5 // pred_check
        %p128 = pneg %p127
      $region22: #{conv_bn.3} parent=5 // pred_check_branch
        %130 = sbr.rel (%p128) target = $region24
      $region23: #{conv_bn.3} parent=5 // pred_region
        // Predicated region
        $region25: #{conv_bn.3} parent=23 // pred_check
          %p131 = pneg %p32
        $region26: #{conv_bn.3} parent=23 // pred_check_branch
          %133 = sbr.rel (%p131) target = $region28
        $region27: #{conv_bn.3} parent=23 // pred_region
          %s134 = smul.u32 256, %s12
          %p135 = scmp.lt.s32.totalorder %s134, 4863
          %s136 = scalar_select %p135, %s134, 4863
          %s137 = smul.addr %s136, 8
          %s138 = scalar_lea.vmem %s0, %s137
          %s139 = smul.u32 256, %s12
        $region28: #{conv_bn.3} parent=23 // pred_fallthru
          _
      $region24: #{conv_bn.3} parent=5 // pred_fallthru
        _
      %p140 = scmp.le.s32.totalorder 1, %s12
      %p141 = scmp.lt.s32.totalorder %s12, 20
      %p142 = pnand %p140, %p141
      %p143 = pneg %p142
      // Predicated region
      $region29: #{conv_bn.3} parent=5 // pred_check
        _
      $region30: #{conv_bn.3} parent=5 // pred_check_branch
        %145 = sbr.rel (%p142) target = $region32
      $region31: #{conv_bn.3} parent=5 // pred_region
        %s146 = ssub.s32 %s12, 1
        %s147 = smul.u32 256, %s17
        %p148 = scmp.lt.s32.totalorder %s147, 4863
        %s149 = scalar_select %p148, %s147, 4863
        %s150 = smul.addr %s149, 8
        %s151 = scalar_lea.vmem %s0, %s150
        %p152 = pneg %p38
        %p153 = pneg %p35
        %p154 = pneg %p59
        %p155 = pneg %p56
        %p156 = pneg %p80
        %p157 = pneg %p77
        %p158 = pneg %p106
        %p159 = pneg %p103
        %s160 = sand.u32 %s93, 1
        %s161 = scalar_lea.sflag [#allocation3], %s160
        %s162 = sand.u32 %s93, 1
        %s163 = smul.addr %s162, 2048
        %s164 = scalar_lea.vmem [#allocation2], %s163
        %s165 = smul.u32 256, %s17
        %p166 = scmp.lt.s32.totalorder %s165, 4863
        %s167 = scalar_select %p166, %s165, 4863
        %s168 = smul.addr %s167, 8
        %s169 = scalar_lea.vmem %s0, %s168
        %s170 = smul.u32 256, %s17
        %s171 = smul.u32 256, %s17
        %v172 = vld [vmem:[%s169] sm:$0xff]
        %v173 = vld [vmem:[%s169 + $0x8] sm:$0xff]
        %v174 = vld [vmem:[%s169 + $0x10] sm:$0xff]
        %v175 = vld [vmem:[%s169 + $0x18] sm:$0xff]
        %v176 = vld [vmem:[%s169 + $0x20] sm:$0xff]
        %v177 = vld [vmem:[%s169 + $0x28] sm:$0xff]
        %v178 = vld [vmem:[%s169 + $0x30] sm:$0xff]
        %v179 = vld [vmem:[%s169 + $0x38] sm:$0xff]
        %v180 = vld [vmem:[%s169 + $0x40] sm:$0xff]
        %v181 = vld [vmem:[%s169 + $0x48] sm:$0xff]
        %v182 = vld [vmem:[%s169 + $0x50] sm:$0xff]
        %v183 = vld [vmem:[%s169 + $0x58] sm:$0xff]
        %v184 = vld [vmem:[%s169 + $0x60] sm:$0xff]
        %v185 = vld [vmem:[%s169 + $0x68] sm:$0xff]
        %v186 = vld [vmem:[%s169 + $0x70] sm:$0xff]
        %v187 = vld [vmem:[%s169 + $0x78] sm:$0xff]
        %v188 = vld [vmem:[%s169 + $0x80] sm:$0xff]
        %v189 = vld [vmem:[%s169 + $0x88] sm:$0xff]
        %v190 = vld [vmem:[%s169 + $0x90] sm:$0xff]
        %v191 = vld [vmem:[%s169 + $0x98] sm:$0xff]
        %v192 = vld [vmem:[%s169 + $0xa0] sm:$0xff]
        %v193 = vld [vmem:[%s169 + $0xa8] sm:$0xff]
        %v194 = vld [vmem:[%s169 + $0xb0] sm:$0xff]
        %v195 = vld [vmem:[%s169 + $0xb8] sm:$0xff]
        %v196 = vld [vmem:[%s169 + $0xc0] sm:$0xff]
        %v197 = vld [vmem:[%s169 + $0xc8] sm:$0xff]
        %v198 = vld [vmem:[%s169 + $0xd0] sm:$0xff]
        %v199 = vld [vmem:[%s169 + $0xd8] sm:$0xff]
        %v200 = vld [vmem:[%s169 + $0xe0] sm:$0xff]
        %v201 = vld [vmem:[%s169 + $0xe8] sm:$0xff]
        %v202 = vld [vmem:[%s169 + $0xf0] sm:$0xff]
        %v203 = vld [vmem:[%s169 + $0xf8] sm:$0xff]
        %v204 = vld [vmem:[%s169 + $0x100] sm:$0xff]
        %v205 = vld [vmem:[%s169 + $0x108] sm:$0xff]
        %v206 = vld [vmem:[%s169 + $0x110] sm:$0xff]
        %v207 = vld [vmem:[%s169 + $0x118] sm:$0xff]
        %v208 = vld [vmem:[%s169 + $0x120] sm:$0xff]
        %v209 = vld [vmem:[%s169 + $0x128] sm:$0xff]
        %v210 = vld [vmem:[%s169 + $0x130] sm:$0xff]
        %v211 = vld [vmem:[%s169 + $0x138] sm:$0xff]
        %v212 = vld [vmem:[%s169 + $0x140] sm:$0xff]
        %v213 = vld [vmem:[%s169 + $0x148] sm:$0xff]
        %v214 = vld [vmem:[%s169 + $0x150] sm:$0xff]
        %v215 = vld [vmem:[%s169 + $0x158] sm:$0xff]
        %v216 = vld [vmem:[%s169 + $0x160] sm:$0xff]
        %v217 = vld [vmem:[%s169 + $0x168] sm:$0xff]
        %v218 = vld [vmem:[%s169 + $0x170] sm:$0xff]
        %v219 = vld [vmem:[%s169 + $0x178] sm:$0xff]
        %v220 = vld [vmem:[%s169 + $0x180] sm:$0xff]
        %v221 = vld [vmem:[%s169 + $0x188] sm:$0xff]
        %v222 = vld [vmem:[%s169 + $0x190] sm:$0xff]
        %v223 = vld [vmem:[%s169 + $0x198] sm:$0xff]
        %v224 = vld [vmem:[%s169 + $0x1a0] sm:$0xff]
        %v225 = vld [vmem:[%s169 + $0x1a8] sm:$0xff]
        %v226 = vld [vmem:[%s169 + $0x1b0] sm:$0xff]
        %v227 = vld [vmem:[%s169 + $0x1b8] sm:$0xff]
        %v228 = vld [vmem:[%s169 + $0x1c0] sm:$0xff]
        %v229 = vld [vmem:[%s169 + $0x1c8] sm:$0xff]
        %v230 = vld [vmem:[%s169 + $0x1d0] sm:$0xff]
        %v231 = vld [vmem:[%s169 + $0x1d8] sm:$0xff]
        %v232 = vld [vmem:[%s169 + $0x1e0] sm:$0xff]
        %v233 = vld [vmem:[%s169 + $0x1e8] sm:$0xff]
        %v234 = vld [vmem:[%s169 + $0x1f0] sm:$0xff]
        %v235 = vld [vmem:[%s169 + $0x1f8] sm:$0xff]
        %v236 = vld [vmem:[%s169 + $0x200] sm:$0xff]
        %v237 = vld [vmem:[%s169 + $0x208] sm:$0xff]
        %v238 = vld [vmem:[%s169 + $0x210] sm:$0xff]
        %v239 = vld [vmem:[%s169 + $0x218] sm:$0xff]
        %v240 = vld [vmem:[%s169 + $0x220] sm:$0xff]
        %v241 = vld [vmem:[%s169 + $0x228] sm:$0xff]
        %v242 = vld [vmem:[%s169 + $0x230] sm:$0xff]
        %v243 = vld [vmem:[%s169 + $0x238] sm:$0xff]
        %v244 = vld [vmem:[%s169 + $0x240] sm:$0xff]
        %v245 = vld [vmem:[%s169 + $0x248] sm:$0xff]
        %v246 = vld [vmem:[%s169 + $0x250] sm:$0xff]
        %v247 = vld [vmem:[%s169 + $0x258] sm:$0xff]
        %v248 = vld [vmem:[%s169 + $0x260] sm:$0xff]
        %v249 = vld [vmem:[%s169 + $0x268] sm:$0xff]
        %v250 = vld [vmem:[%s169 + $0x270] sm:$0xff]
        %v251 = vld [vmem:[%s169 + $0x278] sm:$0xff]
        %v252 = vld [vmem:[%s169 + $0x280] sm:$0xff]
        %v253 = vld [vmem:[%s169 + $0x288] sm:$0xff]
        %v254 = vld [vmem:[%s169 + $0x290] sm:$0xff]
        %v255 = vld [vmem:[%s169 + $0x298] sm:$0xff]
        %v256 = vld [vmem:[%s169 + $0x2a0] sm:$0xff]
        %v257 = vld [vmem:[%s169 + $0x2a8] sm:$0xff]
        %v258 = vld [vmem:[%s169 + $0x2b0] sm:$0xff]
        %v259 = vld [vmem:[%s169 + $0x2b8] sm:$0xff]
        %v260 = vld [vmem:[%s169 + $0x2c0] sm:$0xff]
        %v261 = vld [vmem:[%s169 + $0x2c8] sm:$0xff]
        %v262 = vld [vmem:[%s169 + $0x2d0] sm:$0xff]
        %v263 = vld [vmem:[%s169 + $0x2d8] sm:$0xff]
        %v264 = vld [vmem:[%s169 + $0x2e0] sm:$0xff]
        %v265 = vld [vmem:[%s169 + $0x2e8] sm:$0xff]
        %v266 = vld [vmem:[%s169 + $0x2f0] sm:$0xff]
        %v267 = vld [vmem:[%s169 + $0x2f8] sm:$0xff]
        %v268 = vld [vmem:[%s169 + $0x300] sm:$0xff]
        %v269 = vld [vmem:[%s169 + $0x308] sm:$0xff]
        %v270 = vld [vmem:[%s169 + $0x310] sm:$0xff]
        %v271 = vld [vmem:[%s169 + $0x318] sm:$0xff]
        %v272 = vld [vmem:[%s169 + $0x320] sm:$0xff]
        %v273 = vld [vmem:[%s169 + $0x328] sm:$0xff]
        %v274 = vld [vmem:[%s169 + $0x330] sm:$0xff]
        %v275 = vld [vmem:[%s169 + $0x338] sm:$0xff]
        %v276 = vld [vmem:[%s169 + $0x340] sm:$0xff]
        %v277 = vld [vmem:[%s169 + $0x348] sm:$0xff]
        %v278 = vld [vmem:[%s169 + $0x350] sm:$0xff]
        %v279 = vld [vmem:[%s169 + $0x358] sm:$0xff]
        %v280 = vld [vmem:[%s169 + $0x360] sm:$0xff]
        %v281 = vld [vmem:[%s169 + $0x368] sm:$0xff]
        %v282 = vld [vmem:[%s169 + $0x370] sm:$0xff]
        %v283 = vld [vmem:[%s169 + $0x378] sm:$0xff]
        %v284 = vld [vmem:[%s169 + $0x380] sm:$0xff]
        %v285 = vld [vmem:[%s169 + $0x388] sm:$0xff]
        %v286 = vld [vmem:[%s169 + $0x390] sm:$0xff]
        %v287 = vld [vmem:[%s169 + $0x398] sm:$0xff]
        %v288 = vld [vmem:[%s169 + $0x3a0] sm:$0xff]
        %v289 = vld [vmem:[%s169 + $0x3a8] sm:$0xff]
        %v290 = vld [vmem:[%s169 + $0x3b0] sm:$0xff]
        %v291 = vld [vmem:[%s169 + $0x3b8] sm:$0xff]
        %v292 = vld [vmem:[%s169 + $0x3c0] sm:$0xff]
        %v293 = vld [vmem:[%s169 + $0x3c8] sm:$0xff]
        %v294 = vld [vmem:[%s169 + $0x3d0] sm:$0xff]
        %v295 = vld [vmem:[%s169 + $0x3d8] sm:$0xff]
        %v296 = vld [vmem:[%s169 + $0x3e0] sm:$0xff]
        %v297 = vld [vmem:[%s169 + $0x3e8] sm:$0xff]
        %v298 = vld [vmem:[%s169 + $0x3f0] sm:$0xff]
        %v299 = vld [vmem:[%s169 + $0x3f8] sm:$0xff]
        %v300 = vld [vmem:[%s169 + $0x400] sm:$0xff]
        %v301 = vld [vmem:[%s169 + $0x408] sm:$0xff]
        %v302 = vld [vmem:[%s169 + $0x410] sm:$0xff]
        %v303 = vld [vmem:[%s169 + $0x418] sm:$0xff]
        %v304 = vld [vmem:[%s169 + $0x420] sm:$0xff]
        %v305 = vld [vmem:[%s169 + $0x428] sm:$0xff]
        %v306 = vld [vmem:[%s169 + $0x430] sm:$0xff]
        %v307 = vld [vmem:[%s169 + $0x438] sm:$0xff]
        %v308 = vld [vmem:[%s169 + $0x440] sm:$0xff]
        %v309 = vld [vmem:[%s169 + $0x448] sm:$0xff]
        %v310 = vld [vmem:[%s169 + $0x450] sm:$0xff]
        %v311 = vld [vmem:[%s169 + $0x458] sm:$0xff]
        %v312 = vld [vmem:[%s169 + $0x460] sm:$0xff]
        %v313 = vld [vmem:[%s169 + $0x468] sm:$0xff]
        %v314 = vld [vmem:[%s169 + $0x470] sm:$0xff]
        %v315 = vld [vmem:[%s169 + $0x478] sm:$0xff]
        %v316 = vld [vmem:[%s169 + $0x480] sm:$0xff]
        %v317 = vld [vmem:[%s169 + $0x488] sm:$0xff]
        %v318 = vld [vmem:[%s169 + $0x490] sm:$0xff]
        %v319 = vld [vmem:[%s169 + $0x498] sm:$0xff]
        %v320 = vld [vmem:[%s169 + $0x4a0] sm:$0xff]
        %v321 = vld [vmem:[%s169 + $0x4a8] sm:$0xff]
        %v322 = vld [vmem:[%s169 + $0x4b0] sm:$0xff]
        %v323 = vld [vmem:[%s169 + $0x4b8] sm:$0xff]
        %v324 = vld [vmem:[%s169 + $0x4c0] sm:$0xff]
        %v325 = vld [vmem:[%s169 + $0x4c8] sm:$0xff]
        %v326 = vld [vmem:[%s169 + $0x4d0] sm:$0xff]
        %v327 = vld [vmem:[%s169 + $0x4d8] sm:$0xff]
        %v328 = vld [vmem:[%s169 + $0x4e0] sm:$0xff]
        %v329 = vld [vmem:[%s169 + $0x4e8] sm:$0xff]
        %v330 = vld [vmem:[%s169 + $0x4f0] sm:$0xff]
        %v331 = vld [vmem:[%s169 + $0x4f8] sm:$0xff]
        %v332 = vld [vmem:[%s169 + $0x500] sm:$0xff]
        %v333 = vld [vmem:[%s169 + $0x508] sm:$0xff]
        %v334 = vld [vmem:[%s169 + $0x510] sm:$0xff]
        %v335 = vld [vmem:[%s169 + $0x518] sm:$0xff]
        %v336 = vld [vmem:[%s169 + $0x520] sm:$0xff]
        %v337 = vld [vmem:[%s169 + $0x528] sm:$0xff]
        %v338 = vld [vmem:[%s169 + $0x530] sm:$0xff]
        %v339 = vld [vmem:[%s169 + $0x538] sm:$0xff]
        %v340 = vld [vmem:[%s169 + $0x540] sm:$0xff]
        %v341 = vld [vmem:[%s169 + $0x548] sm:$0xff]
        %v342 = vld [vmem:[%s169 + $0x550] sm:$0xff]
        %v343 = vld [vmem:[%s169 + $0x558] sm:$0xff]
        %v344 = vld [vmem:[%s169 + $0x560] sm:$0xff]
        %v345 = vld [vmem:[%s169 + $0x568] sm:$0xff]
        %v346 = vld [vmem:[%s169 + $0x570] sm:$0xff]
        %v347 = vld [vmem:[%s169 + $0x578] sm:$0xff]
        %v348 = vld [vmem:[%s169 + $0x580] sm:$0xff]
        %v349 = vld [vmem:[%s169 + $0x588] sm:$0xff]
        %v350 = vld [vmem:[%s169 + $0x590] sm:$0xff]
        %v351 = vld [vmem:[%s169 + $0x598] sm:$0xff]
        %v352 = vld [vmem:[%s169 + $0x5a0] sm:$0xff]
        %v353 = vld [vmem:[%s169 + $0x5a8] sm:$0xff]
        %v354 = vld [vmem:[%s169 + $0x5b0] sm:$0xff]
        %v355 = vld [vmem:[%s169 + $0x5b8] sm:$0xff]
        %v356 = vld [vmem:[%s169 + $0x5c0] sm:$0xff]
        %v357 = vld [vmem:[%s169 + $0x5c8] sm:$0xff]
        %v358 = vld [vmem:[%s169 + $0x5d0] sm:$0xff]
        %v359 = vld [vmem:[%s169 + $0x5d8] sm:$0xff]
        %v360 = vld [vmem:[%s169 + $0x5e0] sm:$0xff]
        %v361 = vld [vmem:[%s169 + $0x5e8] sm:$0xff]
        %v362 = vld [vmem:[%s169 + $0x5f0] sm:$0xff]
        %v363 = vld [vmem:[%s169 + $0x5f8] sm:$0xff]
        %v364 = vld [vmem:[%s169 + $0x600] sm:$0xff]
        %v365 = vld [vmem:[%s169 + $0x608] sm:$0xff]
        %v366 = vld [vmem:[%s169 + $0x610] sm:$0xff]
        %v367 = vld [vmem:[%s169 + $0x618] sm:$0xff]
        %v368 = vld [vmem:[%s169 + $0x620] sm:$0xff]
        %v369 = vld [vmem:[%s169 + $0x628] sm:$0xff]
        %v370 = vld [vmem:[%s169 + $0x630] sm:$0xff]
        %v371 = vld [vmem:[%s169 + $0x638] sm:$0xff]
        %v372 = vld [vmem:[%s169 + $0x640] sm:$0xff]
        %v373 = vld [vmem:[%s169 + $0x648] sm:$0xff]
        %v374 = vld [vmem:[%s169 + $0x650] sm:$0xff]
        %v375 = vld [vmem:[%s169 + $0x658] sm:$0xff]
        %v376 = vld [vmem:[%s169 + $0x660] sm:$0xff]
        %v377 = vld [vmem:[%s169 + $0x668] sm:$0xff]
        %v378 = vld [vmem:[%s169 + $0x670] sm:$0xff]
        %v379 = vld [vmem:[%s169 + $0x678] sm:$0xff]
        %v380 = vld [vmem:[%s169 + $0x680] sm:$0xff]
        %v381 = vld [vmem:[%s169 + $0x688] sm:$0xff]
        %v382 = vld [vmem:[%s169 + $0x690] sm:$0xff]
        %v383 = vld [vmem:[%s169 + $0x698] sm:$0xff]
        %v384 = vld [vmem:[%s169 + $0x6a0] sm:$0xff]
        %v385 = vld [vmem:[%s169 + $0x6a8] sm:$0xff]
        %v386 = vld [vmem:[%s169 + $0x6b0] sm:$0xff]
        %v387 = vld [vmem:[%s169 + $0x6b8] sm:$0xff]
        %v388 = vld [vmem:[%s169 + $0x6c0] sm:$0xff]
        %v389 = vld [vmem:[%s169 + $0x6c8] sm:$0xff]
        %v390 = vld [vmem:[%s169 + $0x6d0] sm:$0xff]
        %v391 = vld [vmem:[%s169 + $0x6d8] sm:$0xff]
        %v392 = vld [vmem:[%s169 + $0x6e0] sm:$0xff]
        %v393 = vld [vmem:[%s169 + $0x6e8] sm:$0xff]
        %v394 = vld [vmem:[%s169 + $0x6f0] sm:$0xff]
        %v395 = vld [vmem:[%s169 + $0x6f8] sm:$0xff]
        %v396 = vld [vmem:[%s169 + $0x700] sm:$0xff]
        %v397 = vld [vmem:[%s169 + $0x708] sm:$0xff]
        %v398 = vld [vmem:[%s169 + $0x710] sm:$0xff]
        %v399 = vld [vmem:[%s169 + $0x718] sm:$0xff]
        %v400 = vld [vmem:[%s169 + $0x720] sm:$0xff]
        %v401 = vld [vmem:[%s169 + $0x728] sm:$0xff]
        %v402 = vld [vmem:[%s169 + $0x730] sm:$0xff]
        %v403 = vld [vmem:[%s169 + $0x738] sm:$0xff]
        %v404 = vld [vmem:[%s169 + $0x740] sm:$0xff]
        %v405 = vld [vmem:[%s169 + $0x748] sm:$0xff]
        %v406 = vld [vmem:[%s169 + $0x750] sm:$0xff]
        %v407 = vld [vmem:[%s169 + $0x758] sm:$0xff]
        %v408 = vld [vmem:[%s169 + $0x760] sm:$0xff]
        %v409 = vld [vmem:[%s169 + $0x768] sm:$0xff]
        %v410 = vld [vmem:[%s169 + $0x770] sm:$0xff]
        %v411 = vld [vmem:[%s169 + $0x778] sm:$0xff]
        %v412 = vld [vmem:[%s169 + $0x780] sm:$0xff]
        %v413 = vld [vmem:[%s169 + $0x788] sm:$0xff]
        %v414 = vld [vmem:[%s169 + $0x790] sm:$0xff]
        %v415 = vld [vmem:[%s169 + $0x798] sm:$0xff]
        %v416 = vld [vmem:[%s169 + $0x7a0] sm:$0xff]
        %v417 = vld [vmem:[%s169 + $0x7a8] sm:$0xff]
        %v418 = vld [vmem:[%s169 + $0x7b0] sm:$0xff]
        %v419 = vld [vmem:[%s169 + $0x7b8] sm:$0xff]
        %v420 = vld [vmem:[%s169 + $0x7c0] sm:$0xff]
        %v421 = vld [vmem:[%s169 + $0x7c8] sm:$0xff]
        %v422 = vld [vmem:[%s169 + $0x7d0] sm:$0xff]
        %v423 = vld [vmem:[%s169 + $0x7d8] sm:$0xff]
        %v424 = vld [vmem:[%s169 + $0x7e0] sm:$0xff]
        %v425 = vld [vmem:[%s169 + $0x7e8] sm:$0xff]
        %v426 = vld [vmem:[%s169 + $0x7f0] sm:$0xff]
        %v427 = vld [vmem:[%s169 + $0x7f8] sm:$0xff]
        %v428 = vld [vmem:[%s1] sm:$0x1]
        %v430 = vlaneseq
        %v431 = vshrl.u32 %v430, 7
        %v432 = vsub.s32 0, %v431
        %v433 = vrot.slane %v428, %v432
        %v435 = vmul.f32 %v172, %v433
        %v436 = vmul.f32 %v173, %v433
        %v437 = vmul.f32 %v174, %v433
        %v438 = vmul.f32 %v175, %v433
        %v439 = vmul.f32 %v176, %v433
        %v440 = vmul.f32 %v177, %v433
        %v441 = vmul.f32 %v178, %v433
        %v442 = vmul.f32 %v179, %v433
        %v443 = vmul.f32 %v180, %v433
        %v444 = vmul.f32 %v181, %v433
        %v445 = vmul.f32 %v182, %v433
        %v446 = vmul.f32 %v183, %v433
        %v447 = vmul.f32 %v184, %v433
        %v448 = vmul.f32 %v185, %v433
        %v449 = vmul.f32 %v186, %v433
        %v450 = vmul.f32 %v187, %v433
        %v451 = vmul.f32 %v188, %v433
        %v452 = vmul.f32 %v189, %v433
        %v453 = vmul.f32 %v190, %v433
        %v454 = vmul.f32 %v191, %v433
        %v455 = vmul.f32 %v192, %v433
        %v456 = vmul.f32 %v193, %v433
        %v457 = vmul.f32 %v194, %v433
        %v458 = vmul.f32 %v195, %v433
        %v459 = vmul.f32 %v196, %v433
        %v460 = vmul.f32 %v197, %v433
        %v461 = vmul.f32 %v198, %v433
        %v462 = vmul.f32 %v199, %v433
        %v463 = vmul.f32 %v200, %v433
        %v464 = vmul.f32 %v201, %v433
        %v465 = vmul.f32 %v202, %v433
        %v466 = vmul.f32 %v203, %v433
        %v467 = vmul.f32 %v204, %v433
        %v468 = vmul.f32 %v205, %v433
        %v469 = vmul.f32 %v206, %v433
        %v470 = vmul.f32 %v207, %v433
        %v471 = vmul.f32 %v208, %v433
        %v472 = vmul.f32 %v209, %v433
        %v473 = vmul.f32 %v210, %v433
        %v474 = vmul.f32 %v211, %v433
        %v475 = vmul.f32 %v212, %v433
        %v476 = vmul.f32 %v213, %v433
        %v477 = vmul.f32 %v214, %v433
        %v478 = vmul.f32 %v215, %v433
        %v479 = vmul.f32 %v216, %v433
        %v480 = vmul.f32 %v217, %v433
        %v481 = vmul.f32 %v218, %v433
        %v482 = vmul.f32 %v219, %v433
        %v483 = vmul.f32 %v220, %v433
        %v484 = vmul.f32 %v221, %v433
        %v485 = vmul.f32 %v222, %v433
        %v486 = vmul.f32 %v223, %v433
        %v487 = vmul.f32 %v224, %v433
        %v488 = vmul.f32 %v225, %v433
        %v489 = vmul.f32 %v226, %v433
        %v490 = vmul.f32 %v227, %v433
        %v491 = vmul.f32 %v228, %v433
        %v492 = vmul.f32 %v229, %v433
        %v493 = vmul.f32 %v230, %v433
        %v494 = vmul.f32 %v231, %v433
        %v495 = vmul.f32 %v232, %v433
        %v496 = vmul.f32 %v233, %v433
        %v497 = vmul.f32 %v234, %v433
        %v498 = vmul.f32 %v235, %v433
        %v499 = vmul.f32 %v236, %v433
        %v500 = vmul.f32 %v237, %v433
        %v501 = vmul.f32 %v238, %v433
        %v502 = vmul.f32 %v239, %v433
        %v503 = vmul.f32 %v240, %v433
        %v504 = vmul.f32 %v241, %v433
        %v505 = vmul.f32 %v242, %v433
        %v506 = vmul.f32 %v243, %v433
        %v507 = vmul.f32 %v244, %v433
        %v508 = vmul.f32 %v245, %v433
        %v509 = vmul.f32 %v246, %v433
        %v510 = vmul.f32 %v247, %v433
        %v511 = vmul.f32 %v248, %v433
        %v512 = vmul.f32 %v249, %v433
        %v513 = vmul.f32 %v250, %v433
        %v514 = vmul.f32 %v251, %v433
        %v515 = vmul.f32 %v252, %v433
        %v516 = vmul.f32 %v253, %v433
        %v517 = vmul.f32 %v254, %v433
        %v518 = vmul.f32 %v255, %v433
        %v519 = vmul.f32 %v256, %v433
        %v520 = vmul.f32 %v257, %v433
        %v521 = vmul.f32 %v258, %v433
        %v522 = vmul.f32 %v259, %v433
        %v523 = vmul.f32 %v260, %v433
        %v524 = vmul.f32 %v261, %v433
        %v525 = vmul.f32 %v262, %v433
        %v526 = vmul.f32 %v263, %v433
        %v527 = vmul.f32 %v264, %v433
        %v528 = vmul.f32 %v265, %v433
        %v529 = vmul.f32 %v266, %v433
        %v530 = vmul.f32 %v267, %v433
        %v531 = vmul.f32 %v268, %v433
        %v532 = vmul.f32 %v269, %v433
        %v533 = vmul.f32 %v270, %v433
        %v534 = vmul.f32 %v271, %v433
        %v535 = vmul.f32 %v272, %v433
        %v536 = vmul.f32 %v273, %v433
        %v537 = vmul.f32 %v274, %v433
        %v538 = vmul.f32 %v275, %v433
        %v539 = vmul.f32 %v276, %v433
        %v540 = vmul.f32 %v277, %v433
        %v541 = vmul.f32 %v278, %v433
        %v542 = vmul.f32 %v279, %v433
        %v543 = vmul.f32 %v280, %v433
        %v544 = vmul.f32 %v281, %v433
        %v545 = vmul.f32 %v282, %v433
        %v546 = vmul.f32 %v283, %v433
        %v547 = vmul.f32 %v284, %v433
        %v548 = vmul.f32 %v285, %v433
        %v549 = vmul.f32 %v286, %v433
        %v550 = vmul.f32 %v287, %v433
        %v551 = vmul.f32 %v288, %v433
        %v552 = vmul.f32 %v289, %v433
        %v553 = vmul.f32 %v290, %v433
        %v554 = vmul.f32 %v291, %v433
        %v555 = vmul.f32 %v292, %v433
        %v556 = vmul.f32 %v293, %v433
        %v557 = vmul.f32 %v294, %v433
        %v558 = vmul.f32 %v295, %v433
        %v559 = vmul.f32 %v296, %v433
        %v560 = vmul.f32 %v297, %v433
        %v561 = vmul.f32 %v298, %v433
        %v562 = vmul.f32 %v299, %v433
        %v563 = vmul.f32 %v300, %v433
        %v564 = vmul.f32 %v301, %v433
        %v565 = vmul.f32 %v302, %v433
        %v566 = vmul.f32 %v303, %v433
        %v567 = vmul.f32 %v304, %v433
        %v568 = vmul.f32 %v305, %v433
        %v569 = vmul.f32 %v306, %v433
        %v570 = vmul.f32 %v307, %v433
        %v571 = vmul.f32 %v308, %v433
        %v572 = vmul.f32 %v309, %v433
        %v573 = vmul.f32 %v310, %v433
        %v574 = vmul.f32 %v311, %v433
        %v575 = vmul.f32 %v312, %v433
        %v576 = vmul.f32 %v313, %v433
        %v577 = vmul.f32 %v314, %v433
        %v578 = vmul.f32 %v315, %v433
        %v579 = vmul.f32 %v316, %v433
        %v580 = vmul.f32 %v317, %v433
        %v581 = vmul.f32 %v318, %v433
        %v582 = vmul.f32 %v319, %v433
        %v583 = vmul.f32 %v320, %v433
        %v584 = vmul.f32 %v321, %v433
        %v585 = vmul.f32 %v322, %v433
        %v586 = vmul.f32 %v323, %v433
        %v587 = vmul.f32 %v324, %v433
        %v588 = vmul.f32 %v325, %v433
        %v589 = vmul.f32 %v326, %v433
        %v590 = vmul.f32 %v327, %v433
        %v591 = vmul.f32 %v328, %v433
        %v592 = vmul.f32 %v329, %v433
        %v593 = vmul.f32 %v330, %v433
        %v594 = vmul.f32 %v331, %v433
        %v595 = vmul.f32 %v332, %v433
        %v596 = vmul.f32 %v333, %v433
        %v597 = vmul.f32 %v334, %v433
        %v598 = vmul.f32 %v335, %v433
        %v599 = vmul.f32 %v336, %v433
        %v600 = vmul.f32 %v337, %v433
        %v601 = vmul.f32 %v338, %v433
        %v602 = vmul.f32 %v339, %v433
        %v603 = vmul.f32 %v340, %v433
        %v604 = vmul.f32 %v341, %v433
        %v605 = vmul.f32 %v342, %v433
        %v606 = vmul.f32 %v343, %v433
        %v607 = vmul.f32 %v344, %v433
        %v608 = vmul.f32 %v345, %v433
        %v609 = vmul.f32 %v346, %v433
        %v610 = vmul.f32 %v347, %v433
        %v611 = vmul.f32 %v348, %v433
        %v612 = vmul.f32 %v349, %v433
        %v613 = vmul.f32 %v350, %v433
        %v614 = vmul.f32 %v351, %v433
        %v615 = vmul.f32 %v352, %v433
        %v616 = vmul.f32 %v353, %v433
        %v617 = vmul.f32 %v354, %v433
        %v618 = vmul.f32 %v355, %v433
        %v619 = vmul.f32 %v356, %v433
        %v620 = vmul.f32 %v357, %v433
        %v621 = vmul.f32 %v358, %v433
        %v622 = vmul.f32 %v359, %v433
        %v623 = vmul.f32 %v360, %v433
        %v624 = vmul.f32 %v361, %v433
        %v625 = vmul.f32 %v362, %v433
        %v626 = vmul.f32 %v363, %v433
        %v627 = vmul.f32 %v364, %v433
        %v628 = vmul.f32 %v365, %v433
        %v629 = vmul.f32 %v366, %v433
        %v630 = vmul.f32 %v367, %v433
        %v631 = vmul.f32 %v368, %v433
        %v632 = vmul.f32 %v369, %v433
        %v633 = vmul.f32 %v370, %v433
        %v634 = vmul.f32 %v371, %v433
        %v635 = vmul.f32 %v372, %v433
        %v636 = vmul.f32 %v373, %v433
        %v637 = vmul.f32 %v374, %v433
        %v638 = vmul.f32 %v375, %v433
        %v639 = vmul.f32 %v376, %v433
        %v640 = vmul.f32 %v377, %v433
        %v641 = vmul.f32 %v378, %v433
        %v642 = vmul.f32 %v379, %v433
        %v643 = vmul.f32 %v380, %v433
        %v644 = vmul.f32 %v381, %v433
        %v645 = vmul.f32 %v382, %v433
        %v646 = vmul.f32 %v383, %v433
        %v647 = vmul.f32 %v384, %v433
        %v648 = vmul.f32 %v385, %v433
        %v649 = vmul.f32 %v386, %v433
        %v650 = vmul.f32 %v387, %v433
        %v651 = vmul.f32 %v388, %v433
        %v652 = vmul.f32 %v389, %v433
        %v653 = vmul.f32 %v390, %v433
        %v654 = vmul.f32 %v391, %v433
        %v655 = vmul.f32 %v392, %v433
        %v656 = vmul.f32 %v393, %v433
        %v657 = vmul.f32 %v394, %v433
        %v658 = vmul.f32 %v395, %v433
        %v659 = vmul.f32 %v396, %v433
        %v660 = vmul.f32 %v397, %v433
        %v661 = vmul.f32 %v398, %v433
        %v662 = vmul.f32 %v399, %v433
        %v663 = vmul.f32 %v400, %v433
        %v664 = vmul.f32 %v401, %v433
        %v665 = vmul.f32 %v402, %v433
        %v666 = vmul.f32 %v403, %v433
        %v667 = vmul.f32 %v404, %v433
        %v668 = vmul.f32 %v405, %v433
        %v669 = vmul.f32 %v406, %v433
        %v670 = vmul.f32 %v407, %v433
        %v671 = vmul.f32 %v408, %v433
        %v672 = vmul.f32 %v409, %v433
        %v673 = vmul.f32 %v410, %v433
        %v674 = vmul.f32 %v411, %v433
        %v675 = vmul.f32 %v412, %v433
        %v676 = vmul.f32 %v413, %v433
        %v677 = vmul.f32 %v414, %v433
        %v678 = vmul.f32 %v415, %v433
        %v679 = vmul.f32 %v416, %v433
        %v680 = vmul.f32 %v417, %v433
        %v681 = vmul.f32 %v418, %v433
        %v682 = vmul.f32 %v419, %v433
        %v683 = vmul.f32 %v420, %v433
        %v684 = vmul.f32 %v421, %v433
        %v685 = vmul.f32 %v422, %v433
        %v686 = vmul.f32 %v423, %v433
        %v687 = vmul.f32 %v424, %v433
        %v688 = vmul.f32 %v425, %v433
        %v689 = vmul.f32 %v426, %v433
        %v690 = vmul.f32 %v427, %v433
        %v691 = vld [vmem:[%s2] sm:$0x1]
        %v693 = vlaneseq
        %v694 = vshrl.u32 %v693, 7
        %v695 = vsub.s32 0, %v694
        %v696 = vrot.slane %v691, %v695
        %v698 = vadd.f32 %v435, %v696
        %v699 = vadd.f32 %v436, %v696
        %v700 = vadd.f32 %v437, %v696
        %v701 = vadd.f32 %v438, %v696
        %v702 = vadd.f32 %v439, %v696
        %v703 = vadd.f32 %v440, %v696
        %v704 = vadd.f32 %v441, %v696
        %v705 = vadd.f32 %v442, %v696
        %v706 = vadd.f32 %v443, %v696
        %v707 = vadd.f32 %v444, %v696
        %v708 = vadd.f32 %v445, %v696
        %v709 = vadd.f32 %v446, %v696
        %v710 = vadd.f32 %v447, %v696
        %v711 = vadd.f32 %v448, %v696
        %v712 = vadd.f32 %v449, %v696
        %v713 = vadd.f32 %v450, %v696
        %v714 = vadd.f32 %v451, %v696
        %v715 = vadd.f32 %v452, %v696
        %v716 = vadd.f32 %v453, %v696
        %v717 = vadd.f32 %v454, %v696
        %v718 = vadd.f32 %v455, %v696
        %v719 = vadd.f32 %v456, %v696
        %v720 = vadd.f32 %v457, %v696
        %v721 = vadd.f32 %v458, %v696
        %v722 = vadd.f32 %v459, %v696
        %v723 = vadd.f32 %v460, %v696
        %v724 = vadd.f32 %v461, %v696
        %v725 = vadd.f32 %v462, %v696
        %v726 = vadd.f32 %v463, %v696
        %v727 = vadd.f32 %v464, %v696
        %v728 = vadd.f32 %v465, %v696
        %v729 = vadd.f32 %v466, %v696
        %v730 = vadd.f32 %v467, %v696
        %v731 = vadd.f32 %v468, %v696
        %v732 = vadd.f32 %v469, %v696
        %v733 = vadd.f32 %v470, %v696
        %v734 = vadd.f32 %v471, %v696
        %v735 = vadd.f32 %v472, %v696
        %v736 = vadd.f32 %v473, %v696
        %v737 = vadd.f32 %v474, %v696
        %v738 = vadd.f32 %v475, %v696
        %v739 = vadd.f32 %v476, %v696
        %v740 = vadd.f32 %v477, %v696
        %v741 = vadd.f32 %v478, %v696
        %v742 = vadd.f32 %v479, %v696
        %v743 = vadd.f32 %v480, %v696
        %v744 = vadd.f32 %v481, %v696
        %v745 = vadd.f32 %v482, %v696
        %v746 = vadd.f32 %v483, %v696
        %v747 = vadd.f32 %v484, %v696
        %v748 = vadd.f32 %v485, %v696
        %v749 = vadd.f32 %v486, %v696
        %v750 = vadd.f32 %v487, %v696
        %v751 = vadd.f32 %v488, %v696
        %v752 = vadd.f32 %v489, %v696
        %v753 = vadd.f32 %v490, %v696
        %v754 = vadd.f32 %v491, %v696
        %v755 = vadd.f32 %v492, %v696
        %v756 = vadd.f32 %v493, %v696
        %v757 = vadd.f32 %v494, %v696
        %v758 = vadd.f32 %v495, %v696
        %v759 = vadd.f32 %v496, %v696
        %v760 = vadd.f32 %v497, %v696
        %v761 = vadd.f32 %v498, %v696
        %v762 = vadd.f32 %v499, %v696
        %v763 = vadd.f32 %v500, %v696
        %v764 = vadd.f32 %v501, %v696
        %v765 = vadd.f32 %v502, %v696
        %v766 = vadd.f32 %v503, %v696
        %v767 = vadd.f32 %v504, %v696
        %v768 = vadd.f32 %v505, %v696
        %v769 = vadd.f32 %v506, %v696
        %v770 = vadd.f32 %v507, %v696
        %v771 = vadd.f32 %v508, %v696
        %v772 = vadd.f32 %v509, %v696
        %v773 = vadd.f32 %v510, %v696
        %v774 = vadd.f32 %v511, %v696
        %v775 = vadd.f32 %v512, %v696
        %v776 = vadd.f32 %v513, %v696
        %v777 = vadd.f32 %v514, %v696
        %v778 = vadd.f32 %v515, %v696
        %v779 = vadd.f32 %v516, %v696
        %v780 = vadd.f32 %v517, %v696
        %v781 = vadd.f32 %v518, %v696
        %v782 = vadd.f32 %v519, %v696
        %v783 = vadd.f32 %v520, %v696
        %v784 = vadd.f32 %v521, %v696
        %v785 = vadd.f32 %v522, %v696
        %v786 = vadd.f32 %v523, %v696
        %v787 = vadd.f32 %v524, %v696
        %v788 = vadd.f32 %v525, %v696
        %v789 = vadd.f32 %v526, %v696
        %v790 = vadd.f32 %v527, %v696
        %v791 = vadd.f32 %v528, %v696
        %v792 = vadd.f32 %v529, %v696
        %v793 = vadd.f32 %v530, %v696
        %v794 = vadd.f32 %v531, %v696
        %v795 = vadd.f32 %v532, %v696
        %v796 = vadd.f32 %v533, %v696
        %v797 = vadd.f32 %v534, %v696
        %v798 = vadd.f32 %v535, %v696
        %v799 = vadd.f32 %v536, %v696
        %v800 = vadd.f32 %v537, %v696
        %v801 = vadd.f32 %v538, %v696
        %v802 = vadd.f32 %v539, %v696
        %v803 = vadd.f32 %v540, %v696
        %v804 = vadd.f32 %v541, %v696
        %v805 = vadd.f32 %v542, %v696
        %v806 = vadd.f32 %v543, %v696
        %v807 = vadd.f32 %v544, %v696
        %v808 = vadd.f32 %v545, %v696
        %v809 = vadd.f32 %v546, %v696
        %v810 = vadd.f32 %v547, %v696
        %v811 = vadd.f32 %v548, %v696
        %v812 = vadd.f32 %v549, %v696
        %v813 = vadd.f32 %v550, %v696
        %v814 = vadd.f32 %v551, %v696
        %v815 = vadd.f32 %v552, %v696
        %v816 = vadd.f32 %v553, %v696
        %v817 = vadd.f32 %v554, %v696
        %v818 = vadd.f32 %v555, %v696
        %v819 = vadd.f32 %v556, %v696
        %v820 = vadd.f32 %v557, %v696
        %v821 = vadd.f32 %v558, %v696
        %v822 = vadd.f32 %v559, %v696
        %v823 = vadd.f32 %v560, %v696
        %v824 = vadd.f32 %v561, %v696
        %v825 = vadd.f32 %v562, %v696
        %v826 = vadd.f32 %v563, %v696
        %v827 = vadd.f32 %v564, %v696
        %v828 = vadd.f32 %v565, %v696
        %v829 = vadd.f32 %v566, %v696
        %v830 = vadd.f32 %v567, %v696
        %v831 = vadd.f32 %v568, %v696
        %v832 = vadd.f32 %v569, %v696
        %v833 = vadd.f32 %v570, %v696
        %v834 = vadd.f32 %v571, %v696
        %v835 = vadd.f32 %v572, %v696
        %v836 = vadd.f32 %v573, %v696
        %v837 = vadd.f32 %v574, %v696
        %v838 = vadd.f32 %v575, %v696
        %v839 = vadd.f32 %v576, %v696
        %v840 = vadd.f32 %v577, %v696
        %v841 = vadd.f32 %v578, %v696
        %v842 = vadd.f32 %v579, %v696
        %v843 = vadd.f32 %v580, %v696
        %v844 = vadd.f32 %v581, %v696
        %v845 = vadd.f32 %v582, %v696
        %v846 = vadd.f32 %v583, %v696
        %v847 = vadd.f32 %v584, %v696
        %v848 = vadd.f32 %v585, %v696
        %v849 = vadd.f32 %v586, %v696
        %v850 = vadd.f32 %v587, %v696
        %v851 = vadd.f32 %v588, %v696
        %v852 = vadd.f32 %v589, %v696
        %v853 = vadd.f32 %v590, %v696
        %v854 = vadd.f32 %v591, %v696
        %v855 = vadd.f32 %v592, %v696
        %v856 = vadd.f32 %v593, %v696
        %v857 = vadd.f32 %v594, %v696
        %v858 = vadd.f32 %v595, %v696
        %v859 = vadd.f32 %v596, %v696
        %v860 = vadd.f32 %v597, %v696
        %v861 = vadd.f32 %v598, %v696
        %v862 = vadd.f32 %v599, %v696
        %v863 = vadd.f32 %v600, %v696
        %v864 = vadd.f32 %v601, %v696
        %v865 = vadd.f32 %v602, %v696
        %v866 = vadd.f32 %v603, %v696
        %v867 = vadd.f32 %v604, %v696
        %v868 = vadd.f32 %v605, %v696
        %v869 = vadd.f32 %v606, %v696
        %v870 = vadd.f32 %v607, %v696
        %v871 = vadd.f32 %v608, %v696
        %v872 = vadd.f32 %v609, %v696
        %v873 = vadd.f32 %v610, %v696
        %v874 = vadd.f32 %v611, %v696
        %v875 = vadd.f32 %v612, %v696
        %v876 = vadd.f32 %v613, %v696
        %v877 = vadd.f32 %v614, %v696
        %v878 = vadd.f32 %v615, %v696
        %v879 = vadd.f32 %v616, %v696
        %v880 = vadd.f32 %v617, %v696
        %v881 = vadd.f32 %v618, %v696
        %v882 = vadd.f32 %v619, %v696
        %v883 = vadd.f32 %v620, %v696
        %v884 = vadd.f32 %v621, %v696
        %v885 = vadd.f32 %v622, %v696
        %v886 = vadd.f32 %v623, %v696
        %v887 = vadd.f32 %v624, %v696
        %v888 = vadd.f32 %v625, %v696
        %v889 = vadd.f32 %v626, %v696
        %v890 = vadd.f32 %v627, %v696
        %v891 = vadd.f32 %v628, %v696
        %v892 = vadd.f32 %v629, %v696
        %v893 = vadd.f32 %v630, %v696
        %v894 = vadd.f32 %v631, %v696
        %v895 = vadd.f32 %v632, %v696
        %v896 = vadd.f32 %v633, %v696
        %v897 = vadd.f32 %v634, %v696
        %v898 = vadd.f32 %v635, %v696
        %v899 = vadd.f32 %v636, %v696
        %v900 = vadd.f32 %v637, %v696
        %v901 = vadd.f32 %v638, %v696
        %v902 = vadd.f32 %v639, %v696
        %v903 = vadd.f32 %v640, %v696
        %v904 = vadd.f32 %v641, %v696
        %v905 = vadd.f32 %v642, %v696
        %v906 = vadd.f32 %v643, %v696
        %v907 = vadd.f32 %v644, %v696
        %v908 = vadd.f32 %v645, %v696
        %v909 = vadd.f32 %v646, %v696
        %v910 = vadd.f32 %v647, %v696
        %v911 = vadd.f32 %v648, %v696
        %v912 = vadd.f32 %v649, %v696
        %v913 = vadd.f32 %v650, %v696
        %v914 = vadd.f32 %v651, %v696
        %v915 = vadd.f32 %v652, %v696
        %v916 = vadd.f32 %v653, %v696
        %v917 = vadd.f32 %v654, %v696
        %v918 = vadd.f32 %v655, %v696
        %v919 = vadd.f32 %v656, %v696
        %v920 = vadd.f32 %v657, %v696
        %v921 = vadd.f32 %v658, %v696
        %v922 = vadd.f32 %v659, %v696
        %v923 = vadd.f32 %v660, %v696
        %v924 = vadd.f32 %v661, %v696
        %v925 = vadd.f32 %v662, %v696
        %v926 = vadd.f32 %v663, %v696
        %v927 = vadd.f32 %v664, %v696
        %v928 = vadd.f32 %v665, %v696
        %v929 = vadd.f32 %v666, %v696
        %v930 = vadd.f32 %v667, %v696
        %v931 = vadd.f32 %v668, %v696
        %v932 = vadd.f32 %v669, %v696
        %v933 = vadd.f32 %v670, %v696
        %v934 = vadd.f32 %v671, %v696
        %v935 = vadd.f32 %v672, %v696
        %v936 = vadd.f32 %v673, %v696
        %v937 = vadd.f32 %v674, %v696
        %v938 = vadd.f32 %v675, %v696
        %v939 = vadd.f32 %v676, %v696
        %v940 = vadd.f32 %v677, %v696
        %v941 = vadd.f32 %v678, %v696
        %v942 = vadd.f32 %v679, %v696
        %v943 = vadd.f32 %v680, %v696
        %v944 = vadd.f32 %v681, %v696
        %v945 = vadd.f32 %v682, %v696
        %v946 = vadd.f32 %v683, %v696
        %v947 = vadd.f32 %v684, %v696
        %v948 = vadd.f32 %v685, %v696
        %v949 = vadd.f32 %v686, %v696
        %v950 = vadd.f32 %v687, %v696
        %v951 = vadd.f32 %v688, %v696
        %v952 = vadd.f32 %v689, %v696
        %v953 = vadd.f32 %v690, %v696
        %954 = vst [vmem:[%s164] sm:$0xff] %v698
        %955 = vst [vmem:[%s164 + $0x8] sm:$0xff] %v699
        %956 = vst [vmem:[%s164 + $0x10] sm:$0xff] %v700
        %957 = vst [vmem:[%s164 + $0x18] sm:$0xff] %v701
        %958 = vst [vmem:[%s164 + $0x20] sm:$0xff] %v702
        %959 = vst [vmem:[%s164 + $0x28] sm:$0xff] %v703
        %960 = vst [vmem:[%s164 + $0x30] sm:$0xff] %v704
        %961 = vst [vmem:[%s164 + $0x38] sm:$0xff] %v705
        %962 = vst [vmem:[%s164 + $0x40] sm:$0xff] %v706
        %963 = vst [vmem:[%s164 + $0x48] sm:$0xff] %v707
        %964 = vst [vmem:[%s164 + $0x50] sm:$0xff] %v708
        %965 = vst [vmem:[%s164 + $0x58] sm:$0xff] %v709
        %966 = vst [vmem:[%s164 + $0x60] sm:$0xff] %v710
        %967 = vst [vmem:[%s164 + $0x68] sm:$0xff] %v711
        %968 = vst [vmem:[%s164 + $0x70] sm:$0xff] %v712
        %969 = vst [vmem:[%s164 + $0x78] sm:$0xff] %v713
        %970 = vst [vmem:[%s164 + $0x80] sm:$0xff] %v714
        %971 = vst [vmem:[%s164 + $0x88] sm:$0xff] %v715
        %972 = vst [vmem:[%s164 + $0x90] sm:$0xff] %v716
        %973 = vst [vmem:[%s164 + $0x98] sm:$0xff] %v717
        %974 = vst [vmem:[%s164 + $0xa0] sm:$0xff] %v718
        %975 = vst [vmem:[%s164 + $0xa8] sm:$0xff] %v719
        %976 = vst [vmem:[%s164 + $0xb0] sm:$0xff] %v720
        %977 = vst [vmem:[%s164 + $0xb8] sm:$0xff] %v721
        %978 = vst [vmem:[%s164 + $0xc0] sm:$0xff] %v722
        %979 = vst [vmem:[%s164 + $0xc8] sm:$0xff] %v723
        %980 = vst [vmem:[%s164 + $0xd0] sm:$0xff] %v724
        %981 = vst [vmem:[%s164 + $0xd8] sm:$0xff] %v725
        %982 = vst [vmem:[%s164 + $0xe0] sm:$0xff] %v726
        %983 = vst [vmem:[%s164 + $0xe8] sm:$0xff] %v727
        %984 = vst [vmem:[%s164 + $0xf0] sm:$0xff] %v728
        %985 = vst [vmem:[%s164 + $0xf8] sm:$0xff] %v729
        %986 = vst [vmem:[%s164 + $0x100] sm:$0xff] %v730
        %987 = vst [vmem:[%s164 + $0x108] sm:$0xff] %v731
        %988 = vst [vmem:[%s164 + $0x110] sm:$0xff] %v732
        %989 = vst [vmem:[%s164 + $0x118] sm:$0xff] %v733
        %990 = vst [vmem:[%s164 + $0x120] sm:$0xff] %v734
        %991 = vst [vmem:[%s164 + $0x128] sm:$0xff] %v735
        %992 = vst [vmem:[%s164 + $0x130] sm:$0xff] %v736
        %993 = vst [vmem:[%s164 + $0x138] sm:$0xff] %v737
        %994 = vst [vmem:[%s164 + $0x140] sm:$0xff] %v738
        %995 = vst [vmem:[%s164 + $0x148] sm:$0xff] %v739
        %996 = vst [vmem:[%s164 + $0x150] sm:$0xff] %v740
        %997 = vst [vmem:[%s164 + $0x158] sm:$0xff] %v741
        %998 = vst [vmem:[%s164 + $0x160] sm:$0xff] %v742
        %999 = vst [vmem:[%s164 + $0x168] sm:$0xff] %v743
        %1000 = vst [vmem:[%s164 + $0x170] sm:$0xff] %v744
        %1001 = vst [vmem:[%s164 + $0x178] sm:$0xff] %v745
        %1002 = vst [vmem:[%s164 + $0x180] sm:$0xff] %v746
        %1003 = vst [vmem:[%s164 + $0x188] sm:$0xff] %v747
        %1004 = vst [vmem:[%s164 + $0x190] sm:$0xff] %v748
        %1005 = vst [vmem:[%s164 + $0x198] sm:$0xff] %v749
        %1006 = vst [vmem:[%s164 + $0x1a0] sm:$0xff] %v750
        %1007 = vst [vmem:[%s164 + $0x1a8] sm:$0xff] %v751
        %1008 = vst [vmem:[%s164 + $0x1b0] sm:$0xff] %v752
        %1009 = vst [vmem:[%s164 + $0x1b8] sm:$0xff] %v753
        %1010 = vst [vmem:[%s164 + $0x1c0] sm:$0xff] %v754
        %1011 = vst [vmem:[%s164 + $0x1c8] sm:$0xff] %v755
        %1012 = vst [vmem:[%s164 + $0x1d0] sm:$0xff] %v756
        %1013 = vst [vmem:[%s164 + $0x1d8] sm:$0xff] %v757
        %1014 = vst [vmem:[%s164 + $0x1e0] sm:$0xff] %v758
        %1015 = vst [vmem:[%s164 + $0x1e8] sm:$0xff] %v759
        %1016 = vst [vmem:[%s164 + $0x1f0] sm:$0xff] %v760
        %1017 = vst [vmem:[%s164 + $0x1f8] sm:$0xff] %v761
        %1018 = vst [vmem:[%s164 + $0x200] sm:$0xff] %v762
        %1019 = vst [vmem:[%s164 + $0x208] sm:$0xff] %v763
        %1020 = vst [vmem:[%s164 + $0x210] sm:$0xff] %v764
        %1021 = vst [vmem:[%s164 + $0x218] sm:$0xff] %v765
        %1022 = vst [vmem:[%s164 + $0x220] sm:$0xff] %v766
        %1023 = vst [vmem:[%s164 + $0x228] sm:$0xff] %v767
        %1024 = vst [vmem:[%s164 + $0x230] sm:$0xff] %v768
        %1025 = vst [vmem:[%s164 + $0x238] sm:$0xff] %v769
        %1026 = vst [vmem:[%s164 + $0x240] sm:$0xff] %v770
        %1027 = vst [vmem:[%s164 + $0x248] sm:$0xff] %v771
        %1028 = vst [vmem:[%s164 + $0x250] sm:$0xff] %v772
        %1029 = vst [vmem:[%s164 + $0x258] sm:$0xff] %v773
        %1030 = vst [vmem:[%s164 + $0x260] sm:$0xff] %v774
        %1031 = vst [vmem:[%s164 + $0x268] sm:$0xff] %v775
        %1032 = vst [vmem:[%s164 + $0x270] sm:$0xff] %v776
        %1033 = vst [vmem:[%s164 + $0x278] sm:$0xff] %v777
        %1034 = vst [vmem:[%s164 + $0x280] sm:$0xff] %v778
        %1035 = vst [vmem:[%s164 + $0x288] sm:$0xff] %v779
        %1036 = vst [vmem:[%s164 + $0x290] sm:$0xff] %v780
        %1037 = vst [vmem:[%s164 + $0x298] sm:$0xff] %v781
        %1038 = vst [vmem:[%s164 + $0x2a0] sm:$0xff] %v782
        %1039 = vst [vmem:[%s164 + $0x2a8] sm:$0xff] %v783
        %1040 = vst [vmem:[%s164 + $0x2b0] sm:$0xff] %v784
        %1041 = vst [vmem:[%s164 + $0x2b8] sm:$0xff] %v785
        %1042 = vst [vmem:[%s164 + $0x2c0] sm:$0xff] %v786
        %1043 = vst [vmem:[%s164 + $0x2c8] sm:$0xff] %v787
        %1044 = vst [vmem:[%s164 + $0x2d0] sm:$0xff] %v788
        %1045 = vst [vmem:[%s164 + $0x2d8] sm:$0xff] %v789
        %1046 = vst [vmem:[%s164 + $0x2e0] sm:$0xff] %v790
        %1047 = vst [vmem:[%s164 + $0x2e8] sm:$0xff] %v791
        %1048 = vst [vmem:[%s164 + $0x2f0] sm:$0xff] %v792
        %1049 = vst [vmem:[%s164 + $0x2f8] sm:$0xff] %v793
        %1050 = vst [vmem:[%s164 + $0x300] sm:$0xff] %v794
        %1051 = vst [vmem:[%s164 + $0x308] sm:$0xff] %v795
        %1052 = vst [vmem:[%s164 + $0x310] sm:$0xff] %v796
        %1053 = vst [vmem:[%s164 + $0x318] sm:$0xff] %v797
        %1054 = vst [vmem:[%s164 + $0x320] sm:$0xff] %v798
        %1055 = vst [vmem:[%s164 + $0x328] sm:$0xff] %v799
        %1056 = vst [vmem:[%s164 + $0x330] sm:$0xff] %v800
        %1057 = vst [vmem:[%s164 + $0x338] sm:$0xff] %v801
        %1058 = vst [vmem:[%s164 + $0x340] sm:$0xff] %v802
        %1059 = vst [vmem:[%s164 + $0x348] sm:$0xff] %v803
        %1060 = vst [vmem:[%s164 + $0x350] sm:$0xff] %v804
        %1061 = vst [vmem:[%s164 + $0x358] sm:$0xff] %v805
        %1062 = vst [vmem:[%s164 + $0x360] sm:$0xff] %v806
        %1063 = vst [vmem:[%s164 + $0x368] sm:$0xff] %v807
        %1064 = vst [vmem:[%s164 + $0x370] sm:$0xff] %v808
        %1065 = vst [vmem:[%s164 + $0x378] sm:$0xff] %v809
        %1066 = vst [vmem:[%s164 + $0x380] sm:$0xff] %v810
        %1067 = vst [vmem:[%s164 + $0x388] sm:$0xff] %v811
        %1068 = vst [vmem:[%s164 + $0x390] sm:$0xff] %v812
        %1069 = vst [vmem:[%s164 + $0x398] sm:$0xff] %v813
        %1070 = vst [vmem:[%s164 + $0x3a0] sm:$0xff] %v814
        %1071 = vst [vmem:[%s164 + $0x3a8] sm:$0xff] %v815
        %1072 = vst [vmem:[%s164 + $0x3b0] sm:$0xff] %v816
        %1073 = vst [vmem:[%s164 + $0x3b8] sm:$0xff] %v817
        %1074 = vst [vmem:[%s164 + $0x3c0] sm:$0xff] %v818
        %1075 = vst [vmem:[%s164 + $0x3c8] sm:$0xff] %v819
        %1076 = vst [vmem:[%s164 + $0x3d0] sm:$0xff] %v820
        %1077 = vst [vmem:[%s164 + $0x3d8] sm:$0xff] %v821
        %1078 = vst [vmem:[%s164 + $0x3e0] sm:$0xff] %v822
        %1079 = vst [vmem:[%s164 + $0x3e8] sm:$0xff] %v823
        %1080 = vst [vmem:[%s164 + $0x3f0] sm:$0xff] %v824
        %1081 = vst [vmem:[%s164 + $0x3f8] sm:$0xff] %v825
        %1082 = vst [vmem:[%s164 + $0x400] sm:$0xff] %v826
        %1083 = vst [vmem:[%s164 + $0x408] sm:$0xff] %v827
        %1084 = vst [vmem:[%s164 + $0x410] sm:$0xff] %v828
        %1085 = vst [vmem:[%s164 + $0x418] sm:$0xff] %v829
        %1086 = vst [vmem:[%s164 + $0x420] sm:$0xff] %v830
        %1087 = vst [vmem:[%s164 + $0x428] sm:$0xff] %v831
        %1088 = vst [vmem:[%s164 + $0x430] sm:$0xff] %v832
        %1089 = vst [vmem:[%s164 + $0x438] sm:$0xff] %v833
        %1090 = vst [vmem:[%s164 + $0x440] sm:$0xff] %v834
        %1091 = vst [vmem:[%s164 + $0x448] sm:$0xff] %v835
        %1092 = vst [vmem:[%s164 + $0x450] sm:$0xff] %v836
        %1093 = vst [vmem:[%s164 + $0x458] sm:$0xff] %v837
        %1094 = vst [vmem:[%s164 + $0x460] sm:$0xff] %v838
        %1095 = vst [vmem:[%s164 + $0x468] sm:$0xff] %v839
        %1096 = vst [vmem:[%s164 + $0x470] sm:$0xff] %v840
        %1097 = vst [vmem:[%s164 + $0x478] sm:$0xff] %v841
        %1098 = vst [vmem:[%s164 + $0x480] sm:$0xff] %v842
        %1099 = vst [vmem:[%s164 + $0x488] sm:$0xff] %v843
        %1100 = vst [vmem:[%s164 + $0x490] sm:$0xff] %v844
        %1101 = vst [vmem:[%s164 + $0x498] sm:$0xff] %v845
        %1102 = vst [vmem:[%s164 + $0x4a0] sm:$0xff] %v846
        %1103 = vst [vmem:[%s164 + $0x4a8] sm:$0xff] %v847
        %1104 = vst [vmem:[%s164 + $0x4b0] sm:$0xff] %v848
        %1105 = vst [vmem:[%s164 + $0x4b8] sm:$0xff] %v849
        %1106 = vst [vmem:[%s164 + $0x4c0] sm:$0xff] %v850
        %1107 = vst [vmem:[%s164 + $0x4c8] sm:$0xff] %v851
        %1108 = vst [vmem:[%s164 + $0x4d0] sm:$0xff] %v852
        %1109 = vst [vmem:[%s164 + $0x4d8] sm:$0xff] %v853
        %1110 = vst [vmem:[%s164 + $0x4e0] sm:$0xff] %v854
        %1111 = vst [vmem:[%s164 + $0x4e8] sm:$0xff] %v855
        %1112 = vst [vmem:[%s164 + $0x4f0] sm:$0xff] %v856
        %1113 = vst [vmem:[%s164 + $0x4f8] sm:$0xff] %v857
        %1114 = vst [vmem:[%s164 + $0x500] sm:$0xff] %v858
        %1115 = vst [vmem:[%s164 + $0x508] sm:$0xff] %v859
        %1116 = vst [vmem:[%s164 + $0x510] sm:$0xff] %v860
        %1117 = vst [vmem:[%s164 + $0x518] sm:$0xff] %v861
        %1118 = vst [vmem:[%s164 + $0x520] sm:$0xff] %v862
        %1119 = vst [vmem:[%s164 + $0x528] sm:$0xff] %v863
        %1120 = vst [vmem:[%s164 + $0x530] sm:$0xff] %v864
        %1121 = vst [vmem:[%s164 + $0x538] sm:$0xff] %v865
        %1122 = vst [vmem:[%s164 + $0x540] sm:$0xff] %v866
        %1123 = vst [vmem:[%s164 + $0x548] sm:$0xff] %v867
        %1124 = vst [vmem:[%s164 + $0x550] sm:$0xff] %v868
        %1125 = vst [vmem:[%s164 + $0x558] sm:$0xff] %v869
        %1126 = vst [vmem:[%s164 + $0x560] sm:$0xff] %v870
        %1127 = vst [vmem:[%s164 + $0x568] sm:$0xff] %v871
        %1128 = vst [vmem:[%s164 + $0x570] sm:$0xff] %v872
        %1129 = vst [vmem:[%s164 + $0x578] sm:$0xff] %v873
        %1130 = vst [vmem:[%s164 + $0x580] sm:$0xff] %v874
        %1131 = vst [vmem:[%s164 + $0x588] sm:$0xff] %v875
        %1132 = vst [vmem:[%s164 + $0x590] sm:$0xff] %v876
        %1133 = vst [vmem:[%s164 + $0x598] sm:$0xff] %v877
        %1134 = vst [vmem:[%s164 + $0x5a0] sm:$0xff] %v878
        %1135 = vst [vmem:[%s164 + $0x5a8] sm:$0xff] %v879
        %1136 = vst [vmem:[%s164 + $0x5b0] sm:$0xff] %v880
        %1137 = vst [vmem:[%s164 + $0x5b8] sm:$0xff] %v881
        %1138 = vst [vmem:[%s164 + $0x5c0] sm:$0xff] %v882
        %1139 = vst [vmem:[%s164 + $0x5c8] sm:$0xff] %v883
        %1140 = vst [vmem:[%s164 + $0x5d0] sm:$0xff] %v884
        %1141 = vst [vmem:[%s164 + $0x5d8] sm:$0xff] %v885
        %1142 = vst [vmem:[%s164 + $0x5e0] sm:$0xff] %v886
        %1143 = vst [vmem:[%s164 + $0x5e8] sm:$0xff] %v887
        %1144 = vst [vmem:[%s164 + $0x5f0] sm:$0xff] %v888
        %1145 = vst [vmem:[%s164 + $0x5f8] sm:$0xff] %v889
        %1146 = vst [vmem:[%s164 + $0x600] sm:$0xff] %v890
        %1147 = vst [vmem:[%s164 + $0x608] sm:$0xff] %v891
        %1148 = vst [vmem:[%s164 + $0x610] sm:$0xff] %v892
        %1149 = vst [vmem:[%s164 + $0x618] sm:$0xff] %v893
        %1150 = vst [vmem:[%s164 + $0x620] sm:$0xff] %v894
        %1151 = vst [vmem:[%s164 + $0x628] sm:$0xff] %v895
        %1152 = vst [vmem:[%s164 + $0x630] sm:$0xff] %v896
        %1153 = vst [vmem:[%s164 + $0x638] sm:$0xff] %v897
        %1154 = vst [vmem:[%s164 + $0x640] sm:$0xff] %v898
        %1155 = vst [vmem:[%s164 + $0x648] sm:$0xff] %v899
        %1156 = vst [vmem:[%s164 + $0x650] sm:$0xff] %v900
        %1157 = vst [vmem:[%s164 + $0x658] sm:$0xff] %v901
        %1158 = vst [vmem:[%s164 + $0x660] sm:$0xff] %v902
        %1159 = vst [vmem:[%s164 + $0x668] sm:$0xff] %v903
        %1160 = vst [vmem:[%s164 + $0x670] sm:$0xff] %v904
        %1161 = vst [vmem:[%s164 + $0x678] sm:$0xff] %v905
        %1162 = vst [vmem:[%s164 + $0x680] sm:$0xff] %v906
        %1163 = vst [vmem:[%s164 + $0x688] sm:$0xff] %v907
        %1164 = vst [vmem:[%s164 + $0x690] sm:$0xff] %v908
        %1165 = vst [vmem:[%s164 + $0x698] sm:$0xff] %v909
        %1166 = vst [vmem:[%s164 + $0x6a0] sm:$0xff] %v910
        %1167 = vst [vmem:[%s164 + $0x6a8] sm:$0xff] %v911
        %1168 = vst [vmem:[%s164 + $0x6b0] sm:$0xff] %v912
        %1169 = vst [vmem:[%s164 + $0x6b8] sm:$0xff] %v913
        %1170 = vst [vmem:[%s164 + $0x6c0] sm:$0xff] %v914
        %1171 = vst [vmem:[%s164 + $0x6c8] sm:$0xff] %v915
        %1172 = vst [vmem:[%s164 + $0x6d0] sm:$0xff] %v916
        %1173 = vst [vmem:[%s164 + $0x6d8] sm:$0xff] %v917
        %1174 = vst [vmem:[%s164 + $0x6e0] sm:$0xff] %v918
        %1175 = vst [vmem:[%s164 + $0x6e8] sm:$0xff] %v919
        %1176 = vst [vmem:[%s164 + $0x6f0] sm:$0xff] %v920
        %1177 = vst [vmem:[%s164 + $0x6f8] sm:$0xff] %v921
        %1178 = vst [vmem:[%s164 + $0x700] sm:$0xff] %v922
        %1179 = vst [vmem:[%s164 + $0x708] sm:$0xff] %v923
        %1180 = vst [vmem:[%s164 + $0x710] sm:$0xff] %v924
        %1181 = vst [vmem:[%s164 + $0x718] sm:$0xff] %v925
        %1182 = vst [vmem:[%s164 + $0x720] sm:$0xff] %v926
        %1183 = vst [vmem:[%s164 + $0x728] sm:$0xff] %v927
        %1184 = vst [vmem:[%s164 + $0x730] sm:$0xff] %v928
        %1185 = vst [vmem:[%s164 + $0x738] sm:$0xff] %v929
        %1186 = vst [vmem:[%s164 + $0x740] sm:$0xff] %v930
        %1187 = vst [vmem:[%s164 + $0x748] sm:$0xff] %v931
        %1188 = vst [vmem:[%s164 + $0x750] sm:$0xff] %v932
        %1189 = vst [vmem:[%s164 + $0x758] sm:$0xff] %v933
        %1190 = vst [vmem:[%s164 + $0x760] sm:$0xff] %v934
        %1191 = vst [vmem:[%s164 + $0x768] sm:$0xff] %v935
        %1192 = vst [vmem:[%s164 + $0x770] sm:$0xff] %v936
        %1193 = vst [vmem:[%s164 + $0x778] sm:$0xff] %v937
        %1194 = vst [vmem:[%s164 + $0x780] sm:$0xff] %v938
        %1195 = vst [vmem:[%s164 + $0x788] sm:$0xff] %v939
        %1196 = vst [vmem:[%s164 + $0x790] sm:$0xff] %v940
        %1197 = vst [vmem:[%s164 + $0x798] sm:$0xff] %v941
        %1198 = vst [vmem:[%s164 + $0x7a0] sm:$0xff] %v942
        %1199 = vst [vmem:[%s164 + $0x7a8] sm:$0xff] %v943
        %1200 = vst [vmem:[%s164 + $0x7b0] sm:$0xff] %v944
        %1201 = vst [vmem:[%s164 + $0x7b8] sm:$0xff] %v945
        %1202 = vst [vmem:[%s164 + $0x7c0] sm:$0xff] %v946
        %1203 = vst [vmem:[%s164 + $0x7c8] sm:$0xff] %v947
        %1204 = vst [vmem:[%s164 + $0x7d0] sm:$0xff] %v948
        %1205 = vst [vmem:[%s164 + $0x7d8] sm:$0xff] %v949
        %1206 = vst [vmem:[%s164 + $0x7e0] sm:$0xff] %v950
        %1207 = vst [vmem:[%s164 + $0x7e8] sm:$0xff] %v951
        %1208 = vst [vmem:[%s164 + $0x7f0] sm:$0xff] %v952
        %1209 = vst [vmem:[%s164 + $0x7f8] sm:$0xff] %v953
        %s1210 = sand.u32 %s93, 1
        %s1211 = scalar_lea.sflag [#allocation3], %s1210
        %s1212 = sand.u32 %s93, 1
        %s1213 = smul.addr %s1212, 2048
        %s1214 = scalar_lea.vmem [#allocation2], %s1213
        // Predicated region
        $region33: #{conv_bn.3} parent=31 // pred_check
          %p1215 = pneg %p103
        $region34: #{conv_bn.3} parent=31 // pred_check_branch
          %1217 = sbr.rel (%p1215) target = $region36
        $region35: #{conv_bn.3} parent=31 // pred_region
          %s1218 = smul.u32 256, %s17
          %s1220 = ssub.s32 32768, 32768
          %1221 = vsyncadd %s1211, %s1220
          %s1222 = smul.addr %s1218, 128
          %s1223 = scalar_lea.hbm %s3, %s1222
          %s1224 = sshll.u32 %s1214, 4
          %s1225 = int_to_ptr.vmem [resolvable:$true] %s1224
          %1230 = dma.vmem_to_hbm [thread:$0]  %s1225, 32768, %s1223, %s1211, 128, 128, 8
        $region36: #{conv_bn.3} parent=31 // pred_fallthru
          _
      $region32: #{conv_bn.3} parent=5 // pred_fallthru
        _
      %p1231 = scmp.le.s32.totalorder 2, %s12
      // Predicated region
      $region37: #{conv_bn.3} parent=5 // pred_check
        %p1232 = pneg %p1231
      $region38: #{conv_bn.3} parent=5 // pred_check_branch
        %1234 = sbr.rel (%p1232) target = $region40
      $region39: #{conv_bn.3} parent=5 // pred_region
        %s1235 = ssub.s32 %s12, 2
        // Predicated region
        $region41: #{conv_bn.3} parent=39 // pred_check
          %p1236 = pneg %p109
        $region42: #{conv_bn.3} parent=39 // pred_check_branch
          %1238 = sbr.rel (%p1236) target = $region44
        $region43: #{conv_bn.3} parent=39 // pred_region
          %s1239 = sand.u32 %s94, 1
          %s1240 = scalar_lea.sflag [#allocation3], %s1239
          %s1241 = sand.u32 %s94, 1
          %s1242 = smul.addr %s1241, 2048
          %s1243 = scalar_lea.vmem [#allocation2], %s1242
          %1244 = dma.done %s1240, 32768
        $region44: #{conv_bn.3} parent=39 // pred_fallthru
          _
      $region40: #{conv_bn.3} parent=5 // pred_fallthru
        _
    $region6: #{conv_bn.3} parent=1 // loop_footer
      %s16 = sadd.s32 1, %s12
    $region7: #{conv_bn.3} parent=1 // loop_footer_branch
      %11 = sbr.rel target = $region3
    $region8: #{conv_bn.3} parent=1 // loop_exit
      _
    %1245 = vsyncpa [#allocation3], 1
    %s1246 = scalar_lea.sflag [#allocation3], 1
    %1247 = vsyncpa %s1246, 1

</llo_original>
